<compile_context>
chip_gen: v7x
topology: tpu7x:2x2x1
jax: 0.10.0
libtpu: 0.0.40
codegen_flags: <defaults>
</compile_context>

<pallas_src>
import jax
import jax.numpy as jnp
from jax.experimental import pallas as pl
from jax.experimental.pallas import tpu as pltpu

# ---------------- model dims (small, consistent with the module) ----------------
BATCH = 2
SEQ = 8
INPUT_SIZE = 16
HIDDEN = 32
LABELS = 5
FC_PAD = 128  # lane-dense padded label dim (sliced back to LABELS in the wrapper)


def _sigmoid(x):
    # Same formula in kernel and reference so the comparison stays tight.
    return 1.0 / (1.0 + jnp.exp(-x))


# ---------------------------------- kernel ----------------------------------
def bigru_crf_kernel(x1c_ref, w1_ref, bi1_ref, bhn1_ref, u1_ref,
                     w2_ref, bi2_ref, bhn2_ref, u2_ref,
                     fcw_ref, fcb_ref, out_ref, x2c_scr, out2_scr):
    B, T, H = BATCH, SEQ, HIDDEN
    H2, H4 = 2 * H, 4 * H

    def run_layer(gi, u_bf16, bhn_bc, h0, store_fn):
        """Joint fwd+bwd GRU recurrence, statically unrolled over T steps.

        gi      : (T*B, 6H) hoisted input projection; row block s holds the
                  fwd gates at time s and bwd gates at time T-1-s, columns
                  [r_f|r_b|z_f|z_b|n_f|n_b]; the r/z columns already include
                  the folded recurrent bias.
        u_bf16  : (2H, 6H) recurrent weights, same interleaved column order.
        bhn_bc  : (B, 2H) n-gate recurrent bias, pre-broadcast once.
        h0      : (B, 2H) initial state [h_f | h_b].
        """
        h = h0
        for s in range(T):
            gi_s = gi[s * B:(s + 1) * B, :]                    # contiguous 2-row block
            gh = jnp.dot(h.astype(jnp.bfloat16), u_bf16,
                         preferred_element_type=jnp.float32)   # one MXU push / step
            rz = _sigmoid(gi_s[:, :H4] + gh[:, :H4])           # one 128-lane EUP call
            r, z = rz[:, :H2], rz[:, H2:]
            n = jnp.tanh(gi_s[:, H4:] + r * (gh[:, H4:] + bhn_bc))
            h = n + z * (h - n)                                # directly [h_f | h_b]
            store_fn(s, h)
        return h

    # ---------------- layer 1 ----------------
    # x1c row block s = [x(s) | x(T-1-s)]  (built once in the wrapper, bf16).
    gi1 = jnp.dot(x1c_ref[...], w1_ref[...],
                  preferred_element_type=jnp.float32) + bi1_ref[...]
    bhn1 = jnp.broadcast_to(bhn1_ref[...], (B, H2))
    u1 = u1_ref[...]

    def store1(s, h_new):
        # Dual store makes x2c_scr block s = [h1_f(s) | h1_b(T-1-s) | h1_f(T-1-s) | h1_b(s)];
        # the column permutation is absorbed into w2's row packing.
        x2c_scr[s * B:(s + 1) * B, 0:H2] = h_new
        x2c_scr[(T - 1 - s) * B:(T - s) * B, H2:H4] = h_new

    h1 = run_layer(gi1, u1, bhn1, jnp.zeros((B, H2), jnp.float32), store1)

    # ---------------- layer 2 (seeded with gru_1's final hidden state) ----------------
    gi2 = jnp.dot(x2c_scr[...].astype(jnp.bfloat16), w2_ref[...],
                  preferred_element_type=jnp.float32) + bi2_ref[...]
    bhn2 = jnp.broadcast_to(bhn2_ref[...], (B, H2))
    u2 = u2_ref[...]

    def store2(s, h_new):
        # True time-major layer-2 output: h_f(s) to block s, h_b(T-1-s) to block T-1-s.
        out2_scr[s * B:(s + 1) * B, 0:H] = h_new[:, 0:H]
        out2_scr[(T - 1 - s) * B:(T - s) * B, H:H2] = h_new[:, H:H2]

    run_layer(gi2, u2, bhn2, h1, store2)

    # ---------------- fc: time-major rows, lane-dense (LABELS padded to 128) ----------------
    out_ref[...] = jnp.dot(out2_scr[...].astype(jnp.bfloat16), fcw_ref[...],
                           preferred_element_type=jnp.float32) + fcb_ref[...]


# ---------------- wrapper around pallas_call ----------------
def bigru_crf_forward(x_bf, packed):
    """x_bf: (B, T, input_size) batch-first, like the PyTorch module.
    Returns logits (B, T, LABELS)."""
    B, T, D = x_bf.shape
    N = B * T
    # Time-major rows; pair each timestep with its reverse-time partner so the
    # kernel's per-step gi slice is one contiguous 2-row block.
    x_tm = jnp.transpose(x_bf, (1, 0, 2))                    # (T, B, D)
    x1c = jnp.concatenate([x_tm, x_tm[::-1]], axis=-1)       # (T, B, 2D)
    x1c = x1c.reshape(N, 2 * D).astype(jnp.bfloat16)

    operands = [x1c,
                packed["w1"], packed["bi1"], packed["bhn1"], packed["u1"],
                packed["w2"], packed["bi2"], packed["bhn2"], packed["u2"],
                packed["fcw"], packed["fcb"]]

    vmem = pl.BlockSpec(memory_space=pltpu.MemorySpace.VMEM)
    logits = pl.pallas_call(
        bigru_crf_kernel,
        out_shape=jax.ShapeDtypeStruct((N, FC_PAD), jnp.float32),
        in_specs=[vmem] * len(operands),
        out_specs=vmem,
        scratch_shapes=[pltpu.VMEM((N, 4 * HIDDEN), jnp.float32),   # layer-2 paired input
                        pltpu.VMEM((N, 2 * HIDDEN), jnp.float32)],  # layer-2 output (time-major)
    )(*operands)

    # Rows are time-major (row = t*B + b): batch-first reorder + label slice here.
    return logits.reshape(T, B, FC_PAD).transpose(1, 0, 2)[:, :, :LABELS]


# ---------------- deterministic parameter init + packing ----------------
def init_gru_dir(key, D, H):
    bound = 1.0 / (H ** 0.5)
    ks = jax.random.split(key, 4)
    u = lambda kk, s: jax.random.uniform(kk, s, jnp.float32, -bound, bound)
    return (u(ks[0], (3, D, H)),   # W_ih, gate order [r, z, n]
            u(ks[1], (3, H, H)),   # W_hh
            u(ks[2], (3, 1, H)),   # b_ih
            u(ks[3], (3, 1, H)))   # b_hh


def init_params(key):
    k1f, k1b, k2f, k2b, kfw, kfb = jax.random.split(key, 6)
    fc_bound = 1.0 / ((2 * HIDDEN) ** 0.5)
    return {
        "gru1": {"fwd": init_gru_dir(k1f, INPUT_SIZE, HIDDEN),
                 "bwd": init_gru_dir(k1b, INPUT_SIZE, HIDDEN)},
        "gru2": {"fwd": init_gru_dir(k2f, 2 * HIDDEN, HIDDEN),
                 "bwd": init_gru_dir(k2b, 2 * HIDDEN, HIDDEN)},
        "fc_w": jax.random.uniform(kfw, (2 * HIDDEN, LABELS), jnp.float32,
                                   -fc_bound, fc_bound),
        "fc_b": jax.random.uniform(kfb, (1, LABELS), jnp.float32,
                                   -fc_bound, fc_bound),
    }


def pack_params(params):
    """Pack weights for the kernel (done once, off the hot path).

    Gate columns are interleaved [r_f | r_b | z_f | z_b | n_f | n_b] (H each),
    so the rz block is the first 128 lanes.  Matmul-operand weights are bf16
    (f32 accumulation in-kernel); biases stay f32.
    """
    H = HIDDEN

    def interleave(f_gates, b_gates):
        # f_gates / b_gates: 3 arrays (rows, H), gate order [r, z, n]
        cols = []
        for g in range(3):
            cols += [f_gates[g], b_gates[g]]
        return jnp.concatenate(cols, axis=1)                    # (rows, 6H)

    def rec_pack(fwd, bwd):
        uf, ub = fwd[1], bwd[1]                                 # (3, H, H)
        z = jnp.zeros((H, H), jnp.float32)
        top = interleave([uf[g] for g in range(3)], [z] * 3)    # rows: h_f
        bot = interleave([z] * 3, [ub[g] for g in range(3)])    # rows: h_b
        return jnp.concatenate([top, bot], axis=0)              # (2H, 6H)

    def bias_pack(fwd, bwd):
        bif, bhf = fwd[2], fwd[3]                               # (3, 1, H)
        bib, bhb = bwd[2], bwd[3]
        # r/z recurrent biases folded into the input bias; the n-gate recurrent
        # bias stays separate (must remain inside r * (gh_n + b_hn)).
        bi = jnp.concatenate([bif[0] + bhf[0], bib[0] + bhb[0],
                              bif[1] + bhf[1], bib[1] + bhb[1],
                              bif[2],           bib[2]], axis=1)  # (1, 6H)
        bhn = jnp.concatenate([bhf[2], bhb[2]], axis=1)           # (1, 2H)
        return bi, bhn

    def input_pack_l1(fwd, bwd):
        wf, wb = fwd[0], bwd[0]                                 # (3, D, H)
        D = wf.shape[1]
        z = jnp.zeros((D, H), jnp.float32)
        # kernel layer-1 input row block s = [x(s) | x(T-1-s)]
        top = interleave([wf[g] for g in range(3)], [z] * 3)    # rows: x(s)     -> fwd gates
        bot = interleave([z] * 3, [wb[g] for g in range(3)])    # rows: x(T-1-s) -> bwd gates
        return jnp.concatenate([top, bot], axis=0)              # (2D, 6H)

    def input_pack_l2(fwd, bwd):
        wf, wb = fwd[0], bwd[0]                                 # (3, 2H, H)
        z = jnp.zeros((H, H), jnp.float32)
        # kernel layer-2 input row block s (from the dual-store scratch):
        #   cols 0:H   = h1_f(s)      -> fwd gates, fwd-weight rows 0:H
        #   cols H:2H  = h1_b(T-1-s)  -> bwd gates, bwd-weight rows H:2H
        #   cols 2H:3H = h1_f(T-1-s)  -> bwd gates, bwd-weight rows 0:H
        #   cols 3H:4H = h1_b(s)      -> fwd gates, fwd-weight rows H:2H
        r0 = interleave([wf[g][:H] for g in range(3)], [z] * 3)
        r1 = interleave([z] * 3, [wb[g][H:] for g in range(3)])
        r2 = interleave([z] * 3, [wb[g][:H] for g in range(3)])
        r3 = interleave([wf[g][H:] for g in range(3)], [z] * 3)
        return jnp.concatenate([r0, r1, r2, r3], axis=0)        # (4H, 6H)

    g1f, g1b = params["gru1"]["fwd"], params["gru1"]["bwd"]
    g2f, g2b = params["gru2"]["fwd"], params["gru2"]["bwd"]

    bi1, bhn1 = bias_pack(g1f, g1b)
    bi2, bhn2 = bias_pack(g2f, g2b)
    fcw = jnp.zeros((2 * H, FC_PAD), jnp.float32).at[:, :LABELS].set(params["fc_w"])
    fcb = jnp.zeros((1, FC_PAD), jnp.float32).at[:, :LABELS].set(params["fc_b"])

    return dict(
        w1=input_pack_l1(g1f, g1b).astype(jnp.bfloat16),
        u1=rec_pack(g1f, g1b).astype(jnp.bfloat16),
        bi1=bi1, bhn1=bhn1,
        w2=input_pack_l2(g2f, g2b).astype(jnp.bfloat16),
        u2=rec_pack(g2f, g2b).astype(jnp.bfloat16),
        bi2=bi2, bhn2=bhn2,
        fcw=fcw.astype(jnp.bfloat16), fcb=fcb)


# ---------------- pure-JAX reference (matched matmul operand precision) ----------------
def _gru_dir_ref(x_tm, w_ih, w_hh, b_ih, b_hh, h0, reverse):
    xs = x_tm[::-1] if reverse else x_tm
    w_ih_b = w_ih.astype(jnp.bfloat16)
    w_hh_b = w_hh.astype(jnp.bfloat16)

    def step(h, x):
        gi = jnp.einsum("bd,gdh->gbh", x.astype(jnp.bfloat16), w_ih_b,
                        preferred_element_type=jnp.float32) + b_ih
        gh = jnp.einsum("bh,ghk->gbk", h.astype(jnp.bfloat16), w_hh_b,
                        preferred_element_type=jnp.float32) + b_hh
        r = _sigmoid(gi[0] + gh[0])
        z = _sigmoid(gi[1] + gh[1])
        n = jnp.tanh(gi[2] + r * gh[2])
        h_new = (1.0 - z) * n + z * h
        return h_new, h_new

    h_last, outs = jax.lax.scan(step, h0, xs)
    if reverse:
        outs = outs[::-1]
    return outs, h_last


def bigru_crf_ref(x_bf, params):
    x_tm = jnp.transpose(x_bf, (1, 0, 2)).astype(jnp.float32)
    B = x_bf.shape[0]
    zeros = jnp.zeros((B, HIDDEN), jnp.float32)

    def layer(x, p, h0f, h0b):
        of, hf = _gru_dir_ref(x, *p["fwd"], h0f, False)
        ob, hb = _gru_dir_ref(x, *p["bwd"], h0b, True)
        return jnp.concatenate([of, ob], axis=-1), hf, hb

    out1, hf1, hb1 = layer(x_tm, params["gru1"], zeros, zeros)
    out2, _, _ = layer(out1, params["gru2"], hf1, hb1)
    logits = jnp.einsum("tbf,fl->tbl", out2.astype(jnp.bfloat16),
                        params["fc_w"].astype(jnp.bfloat16),
                        preferred_element_type=jnp.float32) + params["fc_b"][0]
    return logits.transpose(1, 0, 2)


# ---------------- main ----------------
if __name__ == "__main__":
    key = jax.random.PRNGKey(0)
    kx, kp = jax.random.split(key)
    x = jax.random.normal(kx, (BATCH, SEQ, INPUT_SIZE), jnp.float32)
    params = init_params(kp)
    packed = pack_params(params)

    fwd = jax.jit(bigru_crf_forward)
    out = jax.block_until_ready(fwd(x, packed))
    assert out.shape == (BATCH, SEQ, LABELS), out.shape

    # Reference runs the same GRU equations with the same bf16 matmul-operand
    # precision (f32 accumulation), so the comparison stays tight.
    ref = jax.block_until_ready(bigru_crf_ref(x, params))
    max_diff = float(jnp.max(jnp.abs(out - ref)))
    assert jnp.allclose(out, ref, atol=1e-2, rtol=1e-2), max_diff

    print("KERNEL_OK")
</pallas_src>

<mosaic_0001>
module attributes {stable_mosaic.version = 11 : i64} {
  func.func @bigru_crf_kernel(%arg0: memref<16x32xbf16, #tpu.memory_space<vmem>>, %arg1: memref<32x192xbf16, #tpu.memory_space<vmem>>, %arg2: memref<1x192xf32, #tpu.memory_space<vmem>>, %arg3: memref<1x64xf32, #tpu.memory_space<vmem>>, %arg4: memref<64x192xbf16, #tpu.memory_space<vmem>>, %arg5: memref<128x192xbf16, #tpu.memory_space<vmem>>, %arg6: memref<1x192xf32, #tpu.memory_space<vmem>>, %arg7: memref<1x64xf32, #tpu.memory_space<vmem>>, %arg8: memref<64x192xbf16, #tpu.memory_space<vmem>>, %arg9: memref<64x128xbf16, #tpu.memory_space<vmem>>, %arg10: memref<1x128xf32, #tpu.memory_space<vmem>>, %arg11: memref<16x128xf32, #tpu.memory_space<vmem>>, %arg12: memref<16x128xf32, #tpu.memory_space<vmem>>, %arg13: memref<16x64xf32, #tpu.memory_space<vmem>>) attributes {dimension_semantics = [], scalar_prefetch = 0 : i64, scratch_operands = 2 : i64, tpu.core_type = #tpu.core_type<tc>} {
    %c0 = arith.constant 0 : index
    %c0_0 = arith.constant 0 : index
    %0 = vector.load %arg0[%c0, %c0_0] : memref<16x32xbf16, #tpu.memory_space<vmem>>, vector<16x32xbf16>
    %c0_1 = arith.constant 0 : index
    %c0_2 = arith.constant 0 : index
    %1 = vector.load %arg1[%c0_1, %c0_2] : memref<32x192xbf16, #tpu.memory_space<vmem>>, vector<32x192xbf16>
    %cst = arith.constant dense<0.000000e+00> : vector<16x192xf32>
    %2 = tpu.matmul %0, %1, %cst {dimension_numbers = #tpu.dot_dimension_numbers<[1], [0], [0], [1], [0, 0, 1, 1], [], []>} : vector<16x32xbf16>, vector<32x192xbf16>, vector<16x192xf32> -> vector<16x192xf32>
    %c0_3 = arith.constant 0 : index
    %c0_4 = arith.constant 0 : index
    %3 = vector.load %arg2[%c0_3, %c0_4] : memref<1x192xf32, #tpu.memory_space<vmem>>, vector<1x192xf32>
    %4 = vector.broadcast %3 : vector<1x192xf32> to vector<16x192xf32>
    %5 = arith.addf %2, %4 : vector<16x192xf32>
    %c0_5 = arith.constant 0 : index
    %c0_6 = arith.constant 0 : index
    %6 = vector.load %arg3[%c0_5, %c0_6] : memref<1x64xf32, #tpu.memory_space<vmem>>, vector<1x64xf32>
    %7 = vector.shape_cast %6 : vector<1x64xf32> to vector<1x64xf32>
    %8 = vector.broadcast %7 : vector<1x64xf32> to vector<2x64xf32>
    %c0_7 = arith.constant 0 : index
    %c0_8 = arith.constant 0 : index
    %9 = vector.load %arg4[%c0_7, %c0_8] : memref<64x192xbf16, #tpu.memory_space<vmem>>, vector<64x192xbf16>
    %cst_9 = arith.constant 0.000000e+00 : f32
    %10 = vector.broadcast %cst_9 : f32 to vector<2x64xf32>
    %11 = vector.extract_strided_slice %5 {offsets = [0, 0], sizes = [2, 192], strides = [1, 1]} : vector<16x192xf32> to vector<2x192xf32>
    %12 = arith.truncf %10 : vector<2x64xf32> to vector<2x64xbf16>
    %cst_10 = arith.constant dense<0.000000e+00> : vector<2x192xf32>
    %13 = tpu.matmul %12, %9, %cst_10 {dimension_numbers = #tpu.dot_dimension_numbers<[1], [0], [0], [1], [0, 0, 1, 1], [], []>} : vector<2x64xbf16>, vector<64x192xbf16>, vector<2x192xf32> -> vector<2x192xf32>
    %14 = vector.extract_strided_slice %11 {offsets = [0, 0], sizes = [2, 128], strides = [1, 1]} : vector<2x192xf32> to vector<2x128xf32>
    %15 = vector.extract_strided_slice %13 {offsets = [0, 0], sizes = [2, 128], strides = [1, 1]} : vector<2x192xf32> to vector<2x128xf32>
    %16 = arith.addf %14, %15 : vector<2x128xf32>
    %cst_11 = arith.constant 0.000000e+00 : f32
    %17 = vector.broadcast %cst_11 : f32 to vector<2x128xf32>
    %18 = arith.subf %17, %16 : vector<2x128xf32>
    %19 = math.exp %18 : vector<2x128xf32>
    %cst_12 = arith.constant 1.000000e+00 : f32
    %20 = vector.broadcast %cst_12 : f32 to vector<2x128xf32>
    %21 = arith.addf %20, %19 : vector<2x128xf32>
    %cst_13 = arith.constant 1.000000e+00 : f32
    %22 = vector.broadcast %cst_13 : f32 to vector<2x128xf32>
    %23 = arith.divf %22, %21 : vector<2x128xf32>
    %24 = vector.extract_strided_slice %23 {offsets = [0, 0], sizes = [2, 64], strides = [1, 1]} : vector<2x128xf32> to vector<2x64xf32>
    %25 = vector.extract_strided_slice %23 {offsets = [0, 64], sizes = [2, 64], strides = [1, 1]} : vector<2x128xf32> to vector<2x64xf32>
    %26 = vector.extract_strided_slice %11 {offsets = [0, 128], sizes = [2, 64], strides = [1, 1]} : vector<2x192xf32> to vector<2x64xf32>
    %27 = vector.extract_strided_slice %13 {offsets = [0, 128], sizes = [2, 64], strides = [1, 1]} : vector<2x192xf32> to vector<2x64xf32>
    %28 = arith.addf %27, %8 : vector<2x64xf32>
    %29 = arith.mulf %24, %28 : vector<2x64xf32>
    %30 = arith.addf %26, %29 : vector<2x64xf32>
    %31 = math.tanh %30 : vector<2x64xf32>
    %32 = arith.subf %10, %31 : vector<2x64xf32>
    %33 = arith.mulf %25, %32 : vector<2x64xf32>
    %34 = arith.addf %31, %33 : vector<2x64xf32>
    %c0_14 = arith.constant 0 : index
    %c0_15 = arith.constant 0 : index
    %35 = vector.load %arg12[%c0_14, %c0_15] : memref<16x128xf32, #tpu.memory_space<vmem>>, vector<2x64xf32>
    tpu.vector_store %arg12[%c0_14, %c0_15], %34 {strides = array<i32>} : memref<16x128xf32, #tpu.memory_space<vmem>>, vector<2x64xf32>,
    %c14 = arith.constant 14 : index
    %c64 = arith.constant 64 : index
    %36 = vector.load %arg12[%c14, %c64] : memref<16x128xf32, #tpu.memory_space<vmem>>, vector<2x64xf32>
    tpu.vector_store %arg12[%c14, %c64], %34 {strides = array<i32>} : memref<16x128xf32, #tpu.memory_space<vmem>>, vector<2x64xf32>,
    %37 = vector.extract_strided_slice %5 {offsets = [2, 0], sizes = [2, 192], strides = [1, 1]} : vector<16x192xf32> to vector<2x192xf32>
    %38 = arith.truncf %34 : vector<2x64xf32> to vector<2x64xbf16>
    %cst_16 = arith.constant dense<0.000000e+00> : vector<2x192xf32>
    %39 = tpu.matmul %38, %9, %cst_16 {dimension_numbers = #tpu.dot_dimension_numbers<[1], [0], [0], [1], [0, 0, 1, 1], [], []>} : vector<2x64xbf16>, vector<64x192xbf16>, vector<2x192xf32> -> vector<2x192xf32>
    %40 = vector.extract_strided_slice %37 {offsets = [0, 0], sizes = [2, 128], strides = [1, 1]} : vector<2x192xf32> to vector<2x128xf32>
    %41 = vector.extract_strided_slice %39 {offsets = [0, 0], sizes = [2, 128], strides = [1, 1]} : vector<2x192xf32> to vector<2x128xf32>
    %42 = arith.addf %40, %41 : vector<2x128xf32>
    %cst_17 = arith.constant 0.000000e+00 : f32
    %43 = vector.broadcast %cst_17 : f32 to vector<2x128xf32>
    %44 = arith.subf %43, %42 : vector<2x128xf32>
    %45 = math.exp %44 : vector<2x128xf32>
    %cst_18 = arith.constant 1.000000e+00 : f32
    %46 = vector.broadcast %cst_18 : f32 to vector<2x128xf32>
    %47 = arith.addf %46, %45 : vector<2x128xf32>
    %cst_19 = arith.constant 1.000000e+00 : f32
    %48 = vector.broadcast %cst_19 : f32 to vector<2x128xf32>
    %49 = arith.divf %48, %47 : vector<2x128xf32>
    %50 = vector.extract_strided_slice %49 {offsets = [0, 0], sizes = [2, 64], strides = [1, 1]} : vector<2x128xf32> to vector<2x64xf32>
    %51 = vector.extract_strided_slice %49 {offsets = [0, 64], sizes = [2, 64], strides = [1, 1]} : vector<2x128xf32> to vector<2x64xf32>
    %52 = vector.extract_strided_slice %37 {offsets = [0, 128], sizes = [2, 64], strides = [1, 1]} : vector<2x192xf32> to vector<2x64xf32>
    %53 = vector.extract_strided_slice %39 {offsets = [0, 128], sizes = [2, 64], strides = [1, 1]} : vector<2x192xf32> to vector<2x64xf32>
    %54 = arith.addf %53, %8 : vector<2x64xf32>
    %55 = arith.mulf %50, %54 : vector<2x64xf32>
    %56 = arith.addf %52, %55 : vector<2x64xf32>
    %57 = math.tanh %56 : vector<2x64xf32>
    %58 = arith.subf %34, %57 : vector<2x64xf32>
    %59 = arith.mulf %51, %58 : vector<2x64xf32>
    %60 = arith.addf %57, %59 : vector<2x64xf32>
    %c2 = arith.constant 2 : index
    %c0_20 = arith.constant 0 : index
    %61 = vector.load %arg12[%c2, %c0_20] : memref<16x128xf32, #tpu.memory_space<vmem>>, vector<2x64xf32>
    tpu.vector_store %arg12[%c2, %c0_20], %60 {strides = array<i32>} : memref<16x128xf32, #tpu.memory_space<vmem>>, vector<2x64xf32>,
    %c12 = arith.constant 12 : index
    %c64_21 = arith.constant 64 : index
    %62 = vector.load %arg12[%c12, %c64_21] : memref<16x128xf32, #tpu.memory_space<vmem>>, vector<2x64xf32>
    tpu.vector_store %arg12[%c12, %c64_21], %60 {strides = array<i32>} : memref<16x128xf32, #tpu.memory_space<vmem>>, vector<2x64xf32>,
    %63 = vector.extract_strided_slice %5 {offsets = [4, 0], sizes = [2, 192], strides = [1, 1]} : vector<16x192xf32> to vector<2x192xf32>
    %64 = arith.truncf %60 : vector<2x64xf32> to vector<2x64xbf16>
    %cst_22 = arith.constant dense<0.000000e+00> : vector<2x192xf32>
    %65 = tpu.matmul %64, %9, %cst_22 {dimension_numbers = #tpu.dot_dimension_numbers<[1], [0], [0], [1], [0, 0, 1, 1], [], []>} : vector<2x64xbf16>, vector<64x192xbf16>, vector<2x192xf32> -> vector<2x192xf32>
    %66 = vector.extract_strided_slice %63 {offsets = [0, 0], sizes = [2, 128], strides = [1, 1]} : vector<2x192xf32> to vector<2x128xf32>
    %67 = vector.extract_strided_slice %65 {offsets = [0, 0], sizes = [2, 128], strides = [1, 1]} : vector<2x192xf32> to vector<2x128xf32>
    %68 = arith.addf %66, %67 : vector<2x128xf32>
    %cst_23 = arith.constant 0.000000e+00 : f32
    %69 = vector.broadcast %cst_23 : f32 to vector<2x128xf32>
    %70 = arith.subf %69, %68 : vector<2x128xf32>
    %71 = math.exp %70 : vector<2x128xf32>
    %cst_24 = arith.constant 1.000000e+00 : f32
    %72 = vector.broadcast %cst_24 : f32 to vector<2x128xf32>
    %73 = arith.addf %72, %71 : vector<2x128xf32>
    %cst_25 = arith.constant 1.000000e+00 : f32
    %74 = vector.broadcast %cst_25 : f32 to vector<2x128xf32>
    %75 = arith.divf %74, %73 : vector<2x128xf32>
    %76 = vector.extract_strided_slice %75 {offsets = [0, 0], sizes = [2, 64], strides = [1, 1]} : vector<2x128xf32> to vector<2x64xf32>
    %77 = vector.extract_strided_slice %75 {offsets = [0, 64], sizes = [2, 64], strides = [1, 1]} : vector<2x128xf32> to vector<2x64xf32>
    %78 = vector.extract_strided_slice %63 {offsets = [0, 128], sizes = [2, 64], strides = [1, 1]} : vector<2x192xf32> to vector<2x64xf32>
    %79 = vector.extract_strided_slice %65 {offsets = [0, 128], sizes = [2, 64], strides = [1, 1]} : vector<2x192xf32> to vector<2x64xf32>
    %80 = arith.addf %79, %8 : vector<2x64xf32>
    %81 = arith.mulf %76, %80 : vector<2x64xf32>
    %82 = arith.addf %78, %81 : vector<2x64xf32>
    %83 = math.tanh %82 : vector<2x64xf32>
    %84 = arith.subf %60, %83 : vector<2x64xf32>
    %85 = arith.mulf %77, %84 : vector<2x64xf32>
    %86 = arith.addf %83, %85 : vector<2x64xf32>
    %c4 = arith.constant 4 : index
    %c0_26 = arith.constant 0 : index
    %87 = vector.load %arg12[%c4, %c0_26] : memref<16x128xf32, #tpu.memory_space<vmem>>, vector<2x64xf32>
    tpu.vector_store %arg12[%c4, %c0_26], %86 {strides = array<i32>} : memref<16x128xf32, #tpu.memory_space<vmem>>, vector<2x64xf32>,
    %c10 = arith.constant 10 : index
    %c64_27 = arith.constant 64 : index
    %88 = vector.load %arg12[%c10, %c64_27] : memref<16x128xf32, #tpu.memory_space<vmem>>, vector<2x64xf32>
    tpu.vector_store %arg12[%c10, %c64_27], %86 {strides = array<i32>} : memref<16x128xf32, #tpu.memory_space<vmem>>, vector<2x64xf32>,
    %89 = vector.extract_strided_slice %5 {offsets = [6, 0], sizes = [2, 192], strides = [1, 1]} : vector<16x192xf32> to vector<2x192xf32>
    %90 = arith.truncf %86 : vector<2x64xf32> to vector<2x64xbf16>
    %cst_28 = arith.constant dense<0.000000e+00> : vector<2x192xf32>
    %91 = tpu.matmul %90, %9, %cst_28 {dimension_numbers = #tpu.dot_dimension_numbers<[1], [0], [0], [1], [0, 0, 1, 1], [], []>} : vector<2x64xbf16>, vector<64x192xbf16>, vector<2x192xf32> -> vector<2x192xf32>
    %92 = vector.extract_strided_slice %89 {offsets = [0, 0], sizes = [2, 128], strides = [1, 1]} : vector<2x192xf32> to vector<2x128xf32>
    %93 = vector.extract_strided_slice %91 {offsets = [0, 0], sizes = [2, 128], strides = [1, 1]} : vector<2x192xf32> to vector<2x128xf32>
    %94 = arith.addf %92, %93 : vector<2x128xf32>
    %cst_29 = arith.constant 0.000000e+00 : f32
    %95 = vector.broadcast %cst_29 : f32 to vector<2x128xf32>
    %96 = arith.subf %95, %94 : vector<2x128xf32>
    %97 = math.exp %96 : vector<2x128xf32>
    %cst_30 = arith.constant 1.000000e+00 : f32
    %98 = vector.broadcast %cst_30 : f32 to vector<2x128xf32>
    %99 = arith.addf %98, %97 : vector<2x128xf32>
    %cst_31 = arith.constant 1.000000e+00 : f32
    %100 = vector.broadcast %cst_31 : f32 to vector<2x128xf32>
    %101 = arith.divf %100, %99 : vector<2x128xf32>
    %102 = vector.extract_strided_slice %101 {offsets = [0, 0], sizes = [2, 64], strides = [1, 1]} : vector<2x128xf32> to vector<2x64xf32>
    %103 = vector.extract_strided_slice %101 {offsets = [0, 64], sizes = [2, 64], strides = [1, 1]} : vector<2x128xf32> to vector<2x64xf32>
    %104 = vector.extract_strided_slice %89 {offsets = [0, 128], sizes = [2, 64], strides = [1, 1]} : vector<2x192xf32> to vector<2x64xf32>
    %105 = vector.extract_strided_slice %91 {offsets = [0, 128], sizes = [2, 64], strides = [1, 1]} : vector<2x192xf32> to vector<2x64xf32>
    %106 = arith.addf %105, %8 : vector<2x64xf32>
    %107 = arith.mulf %102, %106 : vector<2x64xf32>
    %108 = arith.addf %104, %107 : vector<2x64xf32>
    %109 = math.tanh %108 : vector<2x64xf32>
    %110 = arith.subf %86, %109 : vector<2x64xf32>
    %111 = arith.mulf %103, %110 : vector<2x64xf32>
    %112 = arith.addf %109, %111 : vector<2x64xf32>
    %c6 = arith.constant 6 : index
    %c0_32 = arith.constant 0 : index
    %113 = vector.load %arg12[%c6, %c0_32] : memref<16x128xf32, #tpu.memory_space<vmem>>, vector<2x64xf32>
    tpu.vector_store %arg12[%c6, %c0_32], %112 {strides = array<i32>} : memref<16x128xf32, #tpu.memory_space<vmem>>, vector<2x64xf32>,
    %c8 = arith.constant 8 : index
    %c64_33 = arith.constant 64 : index
    %114 = vector.load %arg12[%c8, %c64_33] : memref<16x128xf32, #tpu.memory_space<vmem>>, vector<2x64xf32>
    tpu.vector_store %arg12[%c8, %c64_33], %112 {strides = array<i32>} : memref<16x128xf32, #tpu.memory_space<vmem>>, vector<2x64xf32>,
    %115 = vector.extract_strided_slice %5 {offsets = [8, 0], sizes = [2, 192], strides = [1, 1]} : vector<16x192xf32> to vector<2x192xf32>
    %116 = arith.truncf %112 : vector<2x64xf32> to vector<2x64xbf16>
    %cst_34 = arith.constant dense<0.000000e+00> : vector<2x192xf32>
    %117 = tpu.matmul %116, %9, %cst_34 {dimension_numbers = #tpu.dot_dimension_numbers<[1], [0], [0], [1], [0, 0, 1, 1], [], []>} : vector<2x64xbf16>, vector<64x192xbf16>, vector<2x192xf32> -> vector<2x192xf32>
    %118 = vector.extract_strided_slice %115 {offsets = [0, 0], sizes = [2, 128], strides = [1, 1]} : vector<2x192xf32> to vector<2x128xf32>
    %119 = vector.extract_strided_slice %117 {offsets = [0, 0], sizes = [2, 128], strides = [1, 1]} : vector<2x192xf32> to vector<2x128xf32>
    %120 = arith.addf %118, %119 : vector<2x128xf32>
    %cst_35 = arith.constant 0.000000e+00 : f32
    %121 = vector.broadcast %cst_35 : f32 to vector<2x128xf32>
    %122 = arith.subf %121, %120 : vector<2x128xf32>
    %123 = math.exp %122 : vector<2x128xf32>
    %cst_36 = arith.constant 1.000000e+00 : f32
    %124 = vector.broadcast %cst_36 : f32 to vector<2x128xf32>
    %125 = arith.addf %124, %123 : vector<2x128xf32>
    %cst_37 = arith.constant 1.000000e+00 : f32
    %126 = vector.broadcast %cst_37 : f32 to vector<2x128xf32>
    %127 = arith.divf %126, %125 : vector<2x128xf32>
    %128 = vector.extract_strided_slice %127 {offsets = [0, 0], sizes = [2, 64], strides = [1, 1]} : vector<2x128xf32> to vector<2x64xf32>
    %129 = vector.extract_strided_slice %127 {offsets = [0, 64], sizes = [2, 64], strides = [1, 1]} : vector<2x128xf32> to vector<2x64xf32>
    %130 = vector.extract_strided_slice %115 {offsets = [0, 128], sizes = [2, 64], strides = [1, 1]} : vector<2x192xf32> to vector<2x64xf32>
    %131 = vector.extract_strided_slice %117 {offsets = [0, 128], sizes = [2, 64], strides = [1, 1]} : vector<2x192xf32> to vector<2x64xf32>
    %132 = arith.addf %131, %8 : vector<2x64xf32>
    %133 = arith.mulf %128, %132 : vector<2x64xf32>
    %134 = arith.addf %130, %133 : vector<2x64xf32>
    %135 = math.tanh %134 : vector<2x64xf32>
    %136 = arith.subf %112, %135 : vector<2x64xf32>
    %137 = arith.mulf %129, %136 : vector<2x64xf32>
    %138 = arith.addf %135, %137 : vector<2x64xf32>
    %c8_38 = arith.constant 8 : index
    %c0_39 = arith.constant 0 : index
    %139 = vector.load %arg12[%c8_38, %c0_39] : memref<16x128xf32, #tpu.memory_space<vmem>>, vector<2x64xf32>
    tpu.vector_store %arg12[%c8_38, %c0_39], %138 {strides = array<i32>} : memref<16x128xf32, #tpu.memory_space<vmem>>, vector<2x64xf32>,
    %c6_40 = arith.constant 6 : index
    %c64_41 = arith.constant 64 : index
    %140 = vector.load %arg12[%c6_40, %c64_41] : memref<16x128xf32, #tpu.memory_space<vmem>>, vector<2x64xf32>
    tpu.vector_store %arg12[%c6_40, %c64_41], %138 {strides = array<i32>} : memref<16x128xf32, #tpu.memory_space<vmem>>, vector<2x64xf32>,
    %141 = vector.extract_strided_slice %5 {offsets = [10, 0], sizes = [2, 192], strides = [1, 1]} : vector<16x192xf32> to vector<2x192xf32>
    %142 = arith.truncf %138 : vector<2x64xf32> to vector<2x64xbf16>
    %cst_42 = arith.constant dense<0.000000e+00> : vector<2x192xf32>
    %143 = tpu.matmul %142, %9, %cst_42 {dimension_numbers = #tpu.dot_dimension_numbers<[1], [0], [0], [1], [0, 0, 1, 1], [], []>} : vector<2x64xbf16>, vector<64x192xbf16>, vector<2x192xf32> -> vector<2x192xf32>
    %144 = vector.extract_strided_slice %141 {offsets = [0, 0], sizes = [2, 128], strides = [1, 1]} : vector<2x192xf32> to vector<2x128xf32>
    %145 = vector.extract_strided_slice %143 {offsets = [0, 0], sizes = [2, 128], strides = [1, 1]} : vector<2x192xf32> to vector<2x128xf32>
    %146 = arith.addf %144, %145 : vector<2x128xf32>
    %cst_43 = arith.constant 0.000000e+00 : f32
    %147 = vector.broadcast %cst_43 : f32 to vector<2x128xf32>
    %148 = arith.subf %147, %146 : vector<2x128xf32>
    %149 = math.exp %148 : vector<2x128xf32>
    %cst_44 = arith.constant 1.000000e+00 : f32
    %150 = vector.broadcast %cst_44 : f32 to vector<2x128xf32>
    %151 = arith.addf %150, %149 : vector<2x128xf32>
    %cst_45 = arith.constant 1.000000e+00 : f32
    %152 = vector.broadcast %cst_45 : f32 to vector<2x128xf32>
    %153 = arith.divf %152, %151 : vector<2x128xf32>
    %154 = vector.extract_strided_slice %153 {offsets = [0, 0], sizes = [2, 64], strides = [1, 1]} : vector<2x128xf32> to vector<2x64xf32>
    %155 = vector.extract_strided_slice %153 {offsets = [0, 64], sizes = [2, 64], strides = [1, 1]} : vector<2x128xf32> to vector<2x64xf32>
    %156 = vector.extract_strided_slice %141 {offsets = [0, 128], sizes = [2, 64], strides = [1, 1]} : vector<2x192xf32> to vector<2x64xf32>
    %157 = vector.extract_strided_slice %143 {offsets = [0, 128], sizes = [2, 64], strides = [1, 1]} : vector<2x192xf32> to vector<2x64xf32>
    %158 = arith.addf %157, %8 : vector<2x64xf32>
    %159 = arith.mulf %154, %158 : vector<2x64xf32>
    %160 = arith.addf %156, %159 : vector<2x64xf32>
    %161 = math.tanh %160 : vector<2x64xf32>
    %162 = arith.subf %138, %161 : vector<2x64xf32>
    %163 = arith.mulf %155, %162 : vector<2x64xf32>
    %164 = arith.addf %161, %163 : vector<2x64xf32>
    %c10_46 = arith.constant 10 : index
    %c0_47 = arith.constant 0 : index
    %165 = vector.load %arg12[%c10_46, %c0_47] : memref<16x128xf32, #tpu.memory_space<vmem>>, vector<2x64xf32>
    tpu.vector_store %arg12[%c10_46, %c0_47], %164 {strides = array<i32>} : memref<16x128xf32, #tpu.memory_space<vmem>>, vector<2x64xf32>,
    %c4_48 = arith.constant 4 : index
    %c64_49 = arith.constant 64 : index
    %166 = vector.load %arg12[%c4_48, %c64_49] : memref<16x128xf32, #tpu.memory_space<vmem>>, vector<2x64xf32>
    tpu.vector_store %arg12[%c4_48, %c64_49], %164 {strides = array<i32>} : memref<16x128xf32, #tpu.memory_space<vmem>>, vector<2x64xf32>,
    %167 = vector.extract_strided_slice %5 {offsets = [12, 0], sizes = [2, 192], strides = [1, 1]} : vector<16x192xf32> to vector<2x192xf32>
    %168 = arith.truncf %164 : vector<2x64xf32> to vector<2x64xbf16>
    %cst_50 = arith.constant dense<0.000000e+00> : vector<2x192xf32>
    %169 = tpu.matmul %168, %9, %cst_50 {dimension_numbers = #tpu.dot_dimension_numbers<[1], [0], [0], [1], [0, 0, 1, 1], [], []>} : vector<2x64xbf16>, vector<64x192xbf16>, vector<2x192xf32> -> vector<2x192xf32>
    %170 = vector.extract_strided_slice %167 {offsets = [0, 0], sizes = [2, 128], strides = [1, 1]} : vector<2x192xf32> to vector<2x128xf32>
    %171 = vector.extract_strided_slice %169 {offsets = [0, 0], sizes = [2, 128], strides = [1, 1]} : vector<2x192xf32> to vector<2x128xf32>
    %172 = arith.addf %170, %171 : vector<2x128xf32>
    %cst_51 = arith.constant 0.000000e+00 : f32
    %173 = vector.broadcast %cst_51 : f32 to vector<2x128xf32>
    %174 = arith.subf %173, %172 : vector<2x128xf32>
    %175 = math.exp %174 : vector<2x128xf32>
    %cst_52 = arith.constant 1.000000e+00 : f32
    %176 = vector.broadcast %cst_52 : f32 to vector<2x128xf32>
    %177 = arith.addf %176, %175 : vector<2x128xf32>
    %cst_53 = arith.constant 1.000000e+00 : f32
    %178 = vector.broadcast %cst_53 : f32 to vector<2x128xf32>
    %179 = arith.divf %178, %177 : vector<2x128xf32>
    %180 = vector.extract_strided_slice %179 {offsets = [0, 0], sizes = [2, 64], strides = [1, 1]} : vector<2x128xf32> to vector<2x64xf32>
    %181 = vector.extract_strided_slice %179 {offsets = [0, 64], sizes = [2, 64], strides = [1, 1]} : vector<2x128xf32> to vector<2x64xf32>
    %182 = vector.extract_strided_slice %167 {offsets = [0, 128], sizes = [2, 64], strides = [1, 1]} : vector<2x192xf32> to vector<2x64xf32>
    %183 = vector.extract_strided_slice %169 {offsets = [0, 128], sizes = [2, 64], strides = [1, 1]} : vector<2x192xf32> to vector<2x64xf32>
    %184 = arith.addf %183, %8 : vector<2x64xf32>
    %185 = arith.mulf %180, %184 : vector<2x64xf32>
    %186 = arith.addf %182, %185 : vector<2x64xf32>
    %187 = math.tanh %186 : vector<2x64xf32>
    %188 = arith.subf %164, %187 : vector<2x64xf32>
    %189 = arith.mulf %181, %188 : vector<2x64xf32>
    %190 = arith.addf %187, %189 : vector<2x64xf32>
    %c12_54 = arith.constant 12 : index
    %c0_55 = arith.constant 0 : index
    %191 = vector.load %arg12[%c12_54, %c0_55] : memref<16x128xf32, #tpu.memory_space<vmem>>, vector<2x64xf32>
    tpu.vector_store %arg12[%c12_54, %c0_55], %190 {strides = array<i32>} : memref<16x128xf32, #tpu.memory_space<vmem>>, vector<2x64xf32>,
    %c2_56 = arith.constant 2 : index
    %c64_57 = arith.constant 64 : index
    %192 = vector.load %arg12[%c2_56, %c64_57] : memref<16x128xf32, #tpu.memory_space<vmem>>, vector<2x64xf32>
    tpu.vector_store %arg12[%c2_56, %c64_57], %190 {strides = array<i32>} : memref<16x128xf32, #tpu.memory_space<vmem>>, vector<2x64xf32>,
    %193 = vector.extract_strided_slice %5 {offsets = [14, 0], sizes = [2, 192], strides = [1, 1]} : vector<16x192xf32> to vector<2x192xf32>
    %194 = arith.truncf %190 : vector<2x64xf32> to vector<2x64xbf16>
    %cst_58 = arith.constant dense<0.000000e+00> : vector<2x192xf32>
    %195 = tpu.matmul %194, %9, %cst_58 {dimension_numbers = #tpu.dot_dimension_numbers<[1], [0], [0], [1], [0, 0, 1, 1], [], []>} : vector<2x64xbf16>, vector<64x192xbf16>, vector<2x192xf32> -> vector<2x192xf32>
    %196 = vector.extract_strided_slice %193 {offsets = [0, 0], sizes = [2, 128], strides = [1, 1]} : vector<2x192xf32> to vector<2x128xf32>
    %197 = vector.extract_strided_slice %195 {offsets = [0, 0], sizes = [2, 128], strides = [1, 1]} : vector<2x192xf32> to vector<2x128xf32>
    %198 = arith.addf %196, %197 : vector<2x128xf32>
    %cst_59 = arith.constant 0.000000e+00 : f32
    %199 = vector.broadcast %cst_59 : f32 to vector<2x128xf32>
    %200 = arith.subf %199, %198 : vector<2x128xf32>
    %201 = math.exp %200 : vector<2x128xf32>
    %cst_60 = arith.constant 1.000000e+00 : f32
    %202 = vector.broadcast %cst_60 : f32 to vector<2x128xf32>
    %203 = arith.addf %202, %201 : vector<2x128xf32>
    %cst_61 = arith.constant 1.000000e+00 : f32
    %204 = vector.broadcast %cst_61 : f32 to vector<2x128xf32>
    %205 = arith.divf %204, %203 : vector<2x128xf32>
    %206 = vector.extract_strided_slice %205 {offsets = [0, 0], sizes = [2, 64], strides = [1, 1]} : vector<2x128xf32> to vector<2x64xf32>
    %207 = vector.extract_strided_slice %205 {offsets = [0, 64], sizes = [2, 64], strides = [1, 1]} : vector<2x128xf32> to vector<2x64xf32>
    %208 = vector.extract_strided_slice %193 {offsets = [0, 128], sizes = [2, 64], strides = [1, 1]} : vector<2x192xf32> to vector<2x64xf32>
    %209 = vector.extract_strided_slice %195 {offsets = [0, 128], sizes = [2, 64], strides = [1, 1]} : vector<2x192xf32> to vector<2x64xf32>
    %210 = arith.addf %209, %8 : vector<2x64xf32>
    %211 = arith.mulf %206, %210 : vector<2x64xf32>
    %212 = arith.addf %208, %211 : vector<2x64xf32>
    %213 = math.tanh %212 : vector<2x64xf32>
    %214 = arith.subf %190, %213 : vector<2x64xf32>
    %215 = arith.mulf %207, %214 : vector<2x64xf32>
    %216 = arith.addf %213, %215 : vector<2x64xf32>
    %c14_62 = arith.constant 14 : index
    %c0_63 = arith.constant 0 : index
    %217 = vector.load %arg12[%c14_62, %c0_63] : memref<16x128xf32, #tpu.memory_space<vmem>>, vector<2x64xf32>
    tpu.vector_store %arg12[%c14_62, %c0_63], %216 {strides = array<i32>} : memref<16x128xf32, #tpu.memory_space<vmem>>, vector<2x64xf32>,
    %c0_64 = arith.constant 0 : index
    %c64_65 = arith.constant 64 : index
    %218 = vector.load %arg12[%c0_64, %c64_65] : memref<16x128xf32, #tpu.memory_space<vmem>>, vector<2x64xf32>
    tpu.vector_store %arg12[%c0_64, %c64_65], %216 {strides = array<i32>} : memref<16x128xf32, #tpu.memory_space<vmem>>, vector<2x64xf32>,
    %c0_66 = arith.constant 0 : index
    %c0_67 = arith.constant 0 : index
    %219 = vector.load %arg12[%c0_66, %c0_67] : memref<16x128xf32, #tpu.memory_space<vmem>>, vector<16x128xf32>
    %220 = arith.truncf %219 : vector<16x128xf32> to vector<16x128xbf16>
    %c0_68 = arith.constant 0 : index
    %c0_69 = arith.constant 0 : index
    %221 = vector.load %arg5[%c0_68, %c0_69] : memref<128x192xbf16, #tpu.memory_space<vmem>>, vector<128x192xbf16>
    %cst_70 = arith.constant dense<0.000000e+00> : vector<16x192xf32>
    %222 = tpu.matmul %220, %221, %cst_70 {dimension_numbers = #tpu.dot_dimension_numbers<[1], [0], [0], [1], [0, 0, 1, 1], [], []>} : vector<16x128xbf16>, vector<128x192xbf16>, vector<16x192xf32> -> vector<16x192xf32>
    %c0_71 = arith.constant 0 : index
    %c0_72 = arith.constant 0 : index
    %223 = vector.load %arg6[%c0_71, %c0_72] : memref<1x192xf32, #tpu.memory_space<vmem>>, vector<1x192xf32>
    %224 = vector.broadcast %223 : vector<1x192xf32> to vector<16x192xf32>
    %225 = arith.addf %222, %224 : vector<16x192xf32>
    %c0_73 = arith.constant 0 : index
    %c0_74 = arith.constant 0 : index
    %226 = vector.load %arg7[%c0_73, %c0_74] : memref<1x64xf32, #tpu.memory_space<vmem>>, vector<1x64xf32>
    %227 = vector.shape_cast %226 : vector<1x64xf32> to vector<1x64xf32>
    %228 = vector.broadcast %227 : vector<1x64xf32> to vector<2x64xf32>
    %c0_75 = arith.constant 0 : index
    %c0_76 = arith.constant 0 : index
    %229 = vector.load %arg8[%c0_75, %c0_76] : memref<64x192xbf16, #tpu.memory_space<vmem>>, vector<64x192xbf16>
    %230 = vector.extract_strided_slice %225 {offsets = [0, 0], sizes = [2, 192], strides = [1, 1]} : vector<16x192xf32> to vector<2x192xf32>
    %231 = arith.truncf %216 : vector<2x64xf32> to vector<2x64xbf16>
    %cst_77 = arith.constant dense<0.000000e+00> : vector<2x192xf32>
    %232 = tpu.matmul %231, %229, %cst_77 {dimension_numbers = #tpu.dot_dimension_numbers<[1], [0], [0], [1], [0, 0, 1, 1], [], []>} : vector<2x64xbf16>, vector<64x192xbf16>, vector<2x192xf32> -> vector<2x192xf32>
    %233 = vector.extract_strided_slice %230 {offsets = [0, 0], sizes = [2, 128], strides = [1, 1]} : vector<2x192xf32> to vector<2x128xf32>
    %234 = vector.extract_strided_slice %232 {offsets = [0, 0], sizes = [2, 128], strides = [1, 1]} : vector<2x192xf32> to vector<2x128xf32>
    %235 = arith.addf %233, %234 : vector<2x128xf32>
    %cst_78 = arith.constant 0.000000e+00 : f32
    %236 = vector.broadcast %cst_78 : f32 to vector<2x128xf32>
    %237 = arith.subf %236, %235 : vector<2x128xf32>
    %238 = math.exp %237 : vector<2x128xf32>
    %cst_79 = arith.constant 1.000000e+00 : f32
    %239 = vector.broadcast %cst_79 : f32 to vector<2x128xf32>
    %240 = arith.addf %239, %238 : vector<2x128xf32>
    %cst_80 = arith.constant 1.000000e+00 : f32
    %241 = vector.broadcast %cst_80 : f32 to vector<2x128xf32>
    %242 = arith.divf %241, %240 : vector<2x128xf32>
    %243 = vector.extract_strided_slice %242 {offsets = [0, 0], sizes = [2, 64], strides = [1, 1]} : vector<2x128xf32> to vector<2x64xf32>
    %244 = vector.extract_strided_slice %242 {offsets = [0, 64], sizes = [2, 64], strides = [1, 1]} : vector<2x128xf32> to vector<2x64xf32>
    %245 = vector.extract_strided_slice %230 {offsets = [0, 128], sizes = [2, 64], strides = [1, 1]} : vector<2x192xf32> to vector<2x64xf32>
    %246 = vector.extract_strided_slice %232 {offsets = [0, 128], sizes = [2, 64], strides = [1, 1]} : vector<2x192xf32> to vector<2x64xf32>
    %247 = arith.addf %246, %228 : vector<2x64xf32>
    %248 = arith.mulf %243, %247 : vector<2x64xf32>
    %249 = arith.addf %245, %248 : vector<2x64xf32>
    %250 = math.tanh %249 : vector<2x64xf32>
    %251 = arith.subf %216, %250 : vector<2x64xf32>
    %252 = arith.mulf %244, %251 : vector<2x64xf32>
    %253 = arith.addf %250, %252 : vector<2x64xf32>
    %254 = vector.extract_strided_slice %253 {offsets = [0, 0], sizes = [2, 32], strides = [1, 1]} : vector<2x64xf32> to vector<2x32xf32>
    %c0_81 = arith.constant 0 : index
    %c0_82 = arith.constant 0 : index
    %255 = vector.load %arg13[%c0_81, %c0_82] : memref<16x64xf32, #tpu.memory_space<vmem>>, vector<2x32xf32>
    tpu.vector_store %arg13[%c0_81, %c0_82], %254 {strides = array<i32>} : memref<16x64xf32, #tpu.memory_space<vmem>>, vector<2x32xf32>,
    %256 = vector.extract_strided_slice %253 {offsets = [0, 32], sizes = [2, 32], strides = [1, 1]} : vector<2x64xf32> to vector<2x32xf32>
    %c14_83 = arith.constant 14 : index
    %c32 = arith.constant 32 : index
    %257 = vector.load %arg13[%c14_83, %c32] : memref<16x64xf32, #tpu.memory_space<vmem>>, vector<2x32xf32>
    tpu.vector_store %arg13[%c14_83, %c32], %256 {strides = array<i32>} : memref<16x64xf32, #tpu.memory_space<vmem>>, vector<2x32xf32>,
    %258 = vector.extract_strided_slice %225 {offsets = [2, 0], sizes = [2, 192], strides = [1, 1]} : vector<16x192xf32> to vector<2x192xf32>
    %259 = arith.truncf %253 : vector<2x64xf32> to vector<2x64xbf16>
    %cst_84 = arith.constant dense<0.000000e+00> : vector<2x192xf32>
    %260 = tpu.matmul %259, %229, %cst_84 {dimension_numbers = #tpu.dot_dimension_numbers<[1], [0], [0], [1], [0, 0, 1, 1], [], []>} : vector<2x64xbf16>, vector<64x192xbf16>, vector<2x192xf32> -> vector<2x192xf32>
    %261 = vector.extract_strided_slice %258 {offsets = [0, 0], sizes = [2, 128], strides = [1, 1]} : vector<2x192xf32> to vector<2x128xf32>
    %262 = vector.extract_strided_slice %260 {offsets = [0, 0], sizes = [2, 128], strides = [1, 1]} : vector<2x192xf32> to vector<2x128xf32>
    %263 = arith.addf %261, %262 : vector<2x128xf32>
    %cst_85 = arith.constant 0.000000e+00 : f32
    %264 = vector.broadcast %cst_85 : f32 to vector<2x128xf32>
    %265 = arith.subf %264, %263 : vector<2x128xf32>
    %266 = math.exp %265 : vector<2x128xf32>
    %cst_86 = arith.constant 1.000000e+00 : f32
    %267 = vector.broadcast %cst_86 : f32 to vector<2x128xf32>
    %268 = arith.addf %267, %266 : vector<2x128xf32>
    %cst_87 = arith.constant 1.000000e+00 : f32
    %269 = vector.broadcast %cst_87 : f32 to vector<2x128xf32>
    %270 = arith.divf %269, %268 : vector<2x128xf32>
    %271 = vector.extract_strided_slice %270 {offsets = [0, 0], sizes = [2, 64], strides = [1, 1]} : vector<2x128xf32> to vector<2x64xf32>
    %272 = vector.extract_strided_slice %270 {offsets = [0, 64], sizes = [2, 64], strides = [1, 1]} : vector<2x128xf32> to vector<2x64xf32>
    %273 = vector.extract_strided_slice %258 {offsets = [0, 128], sizes = [2, 64], strides = [1, 1]} : vector<2x192xf32> to vector<2x64xf32>
    %274 = vector.extract_strided_slice %260 {offsets = [0, 128], sizes = [2, 64], strides = [1, 1]} : vector<2x192xf32> to vector<2x64xf32>
    %275 = arith.addf %274, %228 : vector<2x64xf32>
    %276 = arith.mulf %271, %275 : vector<2x64xf32>
    %277 = arith.addf %273, %276 : vector<2x64xf32>
    %278 = math.tanh %277 : vector<2x64xf32>
    %279 = arith.subf %253, %278 : vector<2x64xf32>
    %280 = arith.mulf %272, %279 : vector<2x64xf32>
    %281 = arith.addf %278, %280 : vector<2x64xf32>
    %282 = vector.extract_strided_slice %281 {offsets = [0, 0], sizes = [2, 32], strides = [1, 1]} : vector<2x64xf32> to vector<2x32xf32>
    %c2_88 = arith.constant 2 : index
    %c0_89 = arith.constant 0 : index
    %283 = vector.load %arg13[%c2_88, %c0_89] : memref<16x64xf32, #tpu.memory_space<vmem>>, vector<2x32xf32>
    tpu.vector_store %arg13[%c2_88, %c0_89], %282 {strides = array<i32>} : memref<16x64xf32, #tpu.memory_space<vmem>>, vector<2x32xf32>,
    %284 = vector.extract_strided_slice %281 {offsets = [0, 32], sizes = [2, 32], strides = [1, 1]} : vector<2x64xf32> to vector<2x32xf32>
    %c12_90 = arith.constant 12 : index
    %c32_91 = arith.constant 32 : index
    %285 = vector.load %arg13[%c12_90, %c32_91] : memref<16x64xf32, #tpu.memory_space<vmem>>, vector<2x32xf32>
    tpu.vector_store %arg13[%c12_90, %c32_91], %284 {strides = array<i32>} : memref<16x64xf32, #tpu.memory_space<vmem>>, vector<2x32xf32>,
    %286 = vector.extract_strided_slice %225 {offsets = [4, 0], sizes = [2, 192], strides = [1, 1]} : vector<16x192xf32> to vector<2x192xf32>
    %287 = arith.truncf %281 : vector<2x64xf32> to vector<2x64xbf16>
    %cst_92 = arith.constant dense<0.000000e+00> : vector<2x192xf32>
    %288 = tpu.matmul %287, %229, %cst_92 {dimension_numbers = #tpu.dot_dimension_numbers<[1], [0], [0], [1], [0, 0, 1, 1], [], []>} : vector<2x64xbf16>, vector<64x192xbf16>, vector<2x192xf32> -> vector<2x192xf32>
    %289 = vector.extract_strided_slice %286 {offsets = [0, 0], sizes = [2, 128], strides = [1, 1]} : vector<2x192xf32> to vector<2x128xf32>
    %290 = vector.extract_strided_slice %288 {offsets = [0, 0], sizes = [2, 128], strides = [1, 1]} : vector<2x192xf32> to vector<2x128xf32>
    %291 = arith.addf %289, %290 : vector<2x128xf32>
    %cst_93 = arith.constant 0.000000e+00 : f32
    %292 = vector.broadcast %cst_93 : f32 to vector<2x128xf32>
    %293 = arith.subf %292, %291 : vector<2x128xf32>
    %294 = math.exp %293 : vector<2x128xf32>
    %cst_94 = arith.constant 1.000000e+00 : f32
    %295 = vector.broadcast %cst_94 : f32 to vector<2x128xf32>
    %296 = arith.addf %295, %294 : vector<2x128xf32>
    %cst_95 = arith.constant 1.000000e+00 : f32
    %297 = vector.broadcast %cst_95 : f32 to vector<2x128xf32>
    %298 = arith.divf %297, %296 : vector<2x128xf32>
    %299 = vector.extract_strided_slice %298 {offsets = [0, 0], sizes = [2, 64], strides = [1, 1]} : vector<2x128xf32> to vector<2x64xf32>
    %300 = vector.extract_strided_slice %298 {offsets = [0, 64], sizes = [2, 64], strides = [1, 1]} : vector<2x128xf32> to vector<2x64xf32>
    %301 = vector.extract_strided_slice %286 {offsets = [0, 128], sizes = [2, 64], strides = [1, 1]} : vector<2x192xf32> to vector<2x64xf32>
    %302 = vector.extract_strided_slice %288 {offsets = [0, 128], sizes = [2, 64], strides = [1, 1]} : vector<2x192xf32> to vector<2x64xf32>
    %303 = arith.addf %302, %228 : vector<2x64xf32>
    %304 = arith.mulf %299, %303 : vector<2x64xf32>
    %305 = arith.addf %301, %304 : vector<2x64xf32>
    %306 = math.tanh %305 : vector<2x64xf32>
    %307 = arith.subf %281, %306 : vector<2x64xf32>
    %308 = arith.mulf %300, %307 : vector<2x64xf32>
    %309 = arith.addf %306, %308 : vector<2x64xf32>
    %310 = vector.extract_strided_slice %309 {offsets = [0, 0], sizes = [2, 32], strides = [1, 1]} : vector<2x64xf32> to vector<2x32xf32>
    %c4_96 = arith.constant 4 : index
    %c0_97 = arith.constant 0 : index
    %311 = vector.load %arg13[%c4_96, %c0_97] : memref<16x64xf32, #tpu.memory_space<vmem>>, vector<2x32xf32>
    tpu.vector_store %arg13[%c4_96, %c0_97], %310 {strides = array<i32>} : memref<16x64xf32, #tpu.memory_space<vmem>>, vector<2x32xf32>,
    %312 = vector.extract_strided_slice %309 {offsets = [0, 32], sizes = [2, 32], strides = [1, 1]} : vector<2x64xf32> to vector<2x32xf32>
    %c10_98 = arith.constant 10 : index
    %c32_99 = arith.constant 32 : index
    %313 = vector.load %arg13[%c10_98, %c32_99] : memref<16x64xf32, #tpu.memory_space<vmem>>, vector<2x32xf32>
    tpu.vector_store %arg13[%c10_98, %c32_99], %312 {strides = array<i32>} : memref<16x64xf32, #tpu.memory_space<vmem>>, vector<2x32xf32>,
    %314 = vector.extract_strided_slice %225 {offsets = [6, 0], sizes = [2, 192], strides = [1, 1]} : vector<16x192xf32> to vector<2x192xf32>
    %315 = arith.truncf %309 : vector<2x64xf32> to vector<2x64xbf16>
    %cst_100 = arith.constant dense<0.000000e+00> : vector<2x192xf32>
    %316 = tpu.matmul %315, %229, %cst_100 {dimension_numbers = #tpu.dot_dimension_numbers<[1], [0], [0], [1], [0, 0, 1, 1], [], []>} : vector<2x64xbf16>, vector<64x192xbf16>, vector<2x192xf32> -> vector<2x192xf32>
    %317 = vector.extract_strided_slice %314 {offsets = [0, 0], sizes = [2, 128], strides = [1, 1]} : vector<2x192xf32> to vector<2x128xf32>
    %318 = vector.extract_strided_slice %316 {offsets = [0, 0], sizes = [2, 128], strides = [1, 1]} : vector<2x192xf32> to vector<2x128xf32>
    %319 = arith.addf %317, %318 : vector<2x128xf32>
    %cst_101 = arith.constant 0.000000e+00 : f32
    %320 = vector.broadcast %cst_101 : f32 to vector<2x128xf32>
    %321 = arith.subf %320, %319 : vector<2x128xf32>
    %322 = math.exp %321 : vector<2x128xf32>
    %cst_102 = arith.constant 1.000000e+00 : f32
    %323 = vector.broadcast %cst_102 : f32 to vector<2x128xf32>
    %324 = arith.addf %323, %322 : vector<2x128xf32>
    %cst_103 = arith.constant 1.000000e+00 : f32
    %325 = vector.broadcast %cst_103 : f32 to vector<2x128xf32>
    %326 = arith.divf %325, %324 : vector<2x128xf32>
    %327 = vector.extract_strided_slice %326 {offsets = [0, 0], sizes = [2, 64], strides = [1, 1]} : vector<2x128xf32> to vector<2x64xf32>
    %328 = vector.extract_strided_slice %326 {offsets = [0, 64], sizes = [2, 64], strides = [1, 1]} : vector<2x128xf32> to vector<2x64xf32>
    %329 = vector.extract_strided_slice %314 {offsets = [0, 128], sizes = [2, 64], strides = [1, 1]} : vector<2x192xf32> to vector<2x64xf32>
    %330 = vector.extract_strided_slice %316 {offsets = [0, 128], sizes = [2, 64], strides = [1, 1]} : vector<2x192xf32> to vector<2x64xf32>
    %331 = arith.addf %330, %228 : vector<2x64xf32>
    %332 = arith.mulf %327, %331 : vector<2x64xf32>
    %333 = arith.addf %329, %332 : vector<2x64xf32>
    %334 = math.tanh %333 : vector<2x64xf32>
    %335 = arith.subf %309, %334 : vector<2x64xf32>
    %336 = arith.mulf %328, %335 : vector<2x64xf32>
    %337 = arith.addf %334, %336 : vector<2x64xf32>
    %338 = vector.extract_strided_slice %337 {offsets = [0, 0], sizes = [2, 32], strides = [1, 1]} : vector<2x64xf32> to vector<2x32xf32>
    %c6_104 = arith.constant 6 : index
    %c0_105 = arith.constant 0 : index
    %339 = vector.load %arg13[%c6_104, %c0_105] : memref<16x64xf32, #tpu.memory_space<vmem>>, vector<2x32xf32>
    tpu.vector_store %arg13[%c6_104, %c0_105], %338 {strides = array<i32>} : memref<16x64xf32, #tpu.memory_space<vmem>>, vector<2x32xf32>,
    %340 = vector.extract_strided_slice %337 {offsets = [0, 32], sizes = [2, 32], strides = [1, 1]} : vector<2x64xf32> to vector<2x32xf32>
    %c8_106 = arith.constant 8 : index
    %c32_107 = arith.constant 32 : index
    %341 = vector.load %arg13[%c8_106, %c32_107] : memref<16x64xf32, #tpu.memory_space<vmem>>, vector<2x32xf32>
    tpu.vector_store %arg13[%c8_106, %c32_107], %340 {strides = array<i32>} : memref<16x64xf32, #tpu.memory_space<vmem>>, vector<2x32xf32>,
    %342 = vector.extract_strided_slice %225 {offsets = [8, 0], sizes = [2, 192], strides = [1, 1]} : vector<16x192xf32> to vector<2x192xf32>
    %343 = arith.truncf %337 : vector<2x64xf32> to vector<2x64xbf16>
    %cst_108 = arith.constant dense<0.000000e+00> : vector<2x192xf32>
    %344 = tpu.matmul %343, %229, %cst_108 {dimension_numbers = #tpu.dot_dimension_numbers<[1], [0], [0], [1], [0, 0, 1, 1], [], []>} : vector<2x64xbf16>, vector<64x192xbf16>, vector<2x192xf32> -> vector<2x192xf32>
    %345 = vector.extract_strided_slice %342 {offsets = [0, 0], sizes = [2, 128], strides = [1, 1]} : vector<2x192xf32> to vector<2x128xf32>
    %346 = vector.extract_strided_slice %344 {offsets = [0, 0], sizes = [2, 128], strides = [1, 1]} : vector<2x192xf32> to vector<2x128xf32>
    %347 = arith.addf %345, %346 : vector<2x128xf32>
    %cst_109 = arith.constant 0.000000e+00 : f32
    %348 = vector.broadcast %cst_109 : f32 to vector<2x128xf32>
    %349 = arith.subf %348, %347 : vector<2x128xf32>
    %350 = math.exp %349 : vector<2x128xf32>
    %cst_110 = arith.constant 1.000000e+00 : f32
    %351 = vector.broadcast %cst_110 : f32 to vector<2x128xf32>
    %352 = arith.addf %351, %350 : vector<2x128xf32>
    %cst_111 = arith.constant 1.000000e+00 : f32
    %353 = vector.broadcast %cst_111 : f32 to vector<2x128xf32>
    %354 = arith.divf %353, %352 : vector<2x128xf32>
    %355 = vector.extract_strided_slice %354 {offsets = [0, 0], sizes = [2, 64], strides = [1, 1]} : vector<2x128xf32> to vector<2x64xf32>
    %356 = vector.extract_strided_slice %354 {offsets = [0, 64], sizes = [2, 64], strides = [1, 1]} : vector<2x128xf32> to vector<2x64xf32>
    %357 = vector.extract_strided_slice %342 {offsets = [0, 128], sizes = [2, 64], strides = [1, 1]} : vector<2x192xf32> to vector<2x64xf32>
    %358 = vector.extract_strided_slice %344 {offsets = [0, 128], sizes = [2, 64], strides = [1, 1]} : vector<2x192xf32> to vector<2x64xf32>
    %359 = arith.addf %358, %228 : vector<2x64xf32>
    %360 = arith.mulf %355, %359 : vector<2x64xf32>
    %361 = arith.addf %357, %360 : vector<2x64xf32>
    %362 = math.tanh %361 : vector<2x64xf32>
    %363 = arith.subf %337, %362 : vector<2x64xf32>
    %364 = arith.mulf %356, %363 : vector<2x64xf32>
    %365 = arith.addf %362, %364 : vector<2x64xf32>
    %366 = vector.extract_strided_slice %365 {offsets = [0, 0], sizes = [2, 32], strides = [1, 1]} : vector<2x64xf32> to vector<2x32xf32>
    %c8_112 = arith.constant 8 : index
    %c0_113 = arith.constant 0 : index
    %367 = vector.load %arg13[%c8_112, %c0_113] : memref<16x64xf32, #tpu.memory_space<vmem>>, vector<2x32xf32>
    tpu.vector_store %arg13[%c8_112, %c0_113], %366 {strides = array<i32>} : memref<16x64xf32, #tpu.memory_space<vmem>>, vector<2x32xf32>,
    %368 = vector.extract_strided_slice %365 {offsets = [0, 32], sizes = [2, 32], strides = [1, 1]} : vector<2x64xf32> to vector<2x32xf32>
    %c6_114 = arith.constant 6 : index
    %c32_115 = arith.constant 32 : index
    %369 = vector.load %arg13[%c6_114, %c32_115] : memref<16x64xf32, #tpu.memory_space<vmem>>, vector<2x32xf32>
    tpu.vector_store %arg13[%c6_114, %c32_115], %368 {strides = array<i32>} : memref<16x64xf32, #tpu.memory_space<vmem>>, vector<2x32xf32>,
    %370 = vector.extract_strided_slice %225 {offsets = [10, 0], sizes = [2, 192], strides = [1, 1]} : vector<16x192xf32> to vector<2x192xf32>
    %371 = arith.truncf %365 : vector<2x64xf32> to vector<2x64xbf16>
    %cst_116 = arith.constant dense<0.000000e+00> : vector<2x192xf32>
    %372 = tpu.matmul %371, %229, %cst_116 {dimension_numbers = #tpu.dot_dimension_numbers<[1], [0], [0], [1], [0, 0, 1, 1], [], []>} : vector<2x64xbf16>, vector<64x192xbf16>, vector<2x192xf32> -> vector<2x192xf32>
    %373 = vector.extract_strided_slice %370 {offsets = [0, 0], sizes = [2, 128], strides = [1, 1]} : vector<2x192xf32> to vector<2x128xf32>
    %374 = vector.extract_strided_slice %372 {offsets = [0, 0], sizes = [2, 128], strides = [1, 1]} : vector<2x192xf32> to vector<2x128xf32>
    %375 = arith.addf %373, %374 : vector<2x128xf32>
    %cst_117 = arith.constant 0.000000e+00 : f32
    %376 = vector.broadcast %cst_117 : f32 to vector<2x128xf32>
    %377 = arith.subf %376, %375 : vector<2x128xf32>
    %378 = math.exp %377 : vector<2x128xf32>
    %cst_118 = arith.constant 1.000000e+00 : f32
    %379 = vector.broadcast %cst_118 : f32 to vector<2x128xf32>
    %380 = arith.addf %379, %378 : vector<2x128xf32>
    %cst_119 = arith.constant 1.000000e+00 : f32
    %381 = vector.broadcast %cst_119 : f32 to vector<2x128xf32>
    %382 = arith.divf %381, %380 : vector<2x128xf32>
    %383 = vector.extract_strided_slice %382 {offsets = [0, 0], sizes = [2, 64], strides = [1, 1]} : vector<2x128xf32> to vector<2x64xf32>
    %384 = vector.extract_strided_slice %382 {offsets = [0, 64], sizes = [2, 64], strides = [1, 1]} : vector<2x128xf32> to vector<2x64xf32>
    %385 = vector.extract_strided_slice %370 {offsets = [0, 128], sizes = [2, 64], strides = [1, 1]} : vector<2x192xf32> to vector<2x64xf32>
    %386 = vector.extract_strided_slice %372 {offsets = [0, 128], sizes = [2, 64], strides = [1, 1]} : vector<2x192xf32> to vector<2x64xf32>
    %387 = arith.addf %386, %228 : vector<2x64xf32>
    %388 = arith.mulf %383, %387 : vector<2x64xf32>
    %389 = arith.addf %385, %388 : vector<2x64xf32>
    %390 = math.tanh %389 : vector<2x64xf32>
    %391 = arith.subf %365, %390 : vector<2x64xf32>
    %392 = arith.mulf %384, %391 : vector<2x64xf32>
    %393 = arith.addf %390, %392 : vector<2x64xf32>
    %394 = vector.extract_strided_slice %393 {offsets = [0, 0], sizes = [2, 32], strides = [1, 1]} : vector<2x64xf32> to vector<2x32xf32>
    %c10_120 = arith.constant 10 : index
    %c0_121 = arith.constant 0 : index
    %395 = vector.load %arg13[%c10_120, %c0_121] : memref<16x64xf32, #tpu.memory_space<vmem>>, vector<2x32xf32>
    tpu.vector_store %arg13[%c10_120, %c0_121], %394 {strides = array<i32>} : memref<16x64xf32, #tpu.memory_space<vmem>>, vector<2x32xf32>,
    %396 = vector.extract_strided_slice %393 {offsets = [0, 32], sizes = [2, 32], strides = [1, 1]} : vector<2x64xf32> to vector<2x32xf32>
    %c4_122 = arith.constant 4 : index
    %c32_123 = arith.constant 32 : index
    %397 = vector.load %arg13[%c4_122, %c32_123] : memref<16x64xf32, #tpu.memory_space<vmem>>, vector<2x32xf32>
    tpu.vector_store %arg13[%c4_122, %c32_123], %396 {strides = array<i32>} : memref<16x64xf32, #tpu.memory_space<vmem>>, vector<2x32xf32>,
    %398 = vector.extract_strided_slice %225 {offsets = [12, 0], sizes = [2, 192], strides = [1, 1]} : vector<16x192xf32> to vector<2x192xf32>
    %399 = arith.truncf %393 : vector<2x64xf32> to vector<2x64xbf16>
    %cst_124 = arith.constant dense<0.000000e+00> : vector<2x192xf32>
    %400 = tpu.matmul %399, %229, %cst_124 {dimension_numbers = #tpu.dot_dimension_numbers<[1], [0], [0], [1], [0, 0, 1, 1], [], []>} : vector<2x64xbf16>, vector<64x192xbf16>, vector<2x192xf32> -> vector<2x192xf32>
    %401 = vector.extract_strided_slice %398 {offsets = [0, 0], sizes = [2, 128], strides = [1, 1]} : vector<2x192xf32> to vector<2x128xf32>
    %402 = vector.extract_strided_slice %400 {offsets = [0, 0], sizes = [2, 128], strides = [1, 1]} : vector<2x192xf32> to vector<2x128xf32>
    %403 = arith.addf %401, %402 : vector<2x128xf32>
    %cst_125 = arith.constant 0.000000e+00 : f32
    %404 = vector.broadcast %cst_125 : f32 to vector<2x128xf32>
    %405 = arith.subf %404, %403 : vector<2x128xf32>
    %406 = math.exp %405 : vector<2x128xf32>
    %cst_126 = arith.constant 1.000000e+00 : f32
    %407 = vector.broadcast %cst_126 : f32 to vector<2x128xf32>
    %408 = arith.addf %407, %406 : vector<2x128xf32>
    %cst_127 = arith.constant 1.000000e+00 : f32
    %409 = vector.broadcast %cst_127 : f32 to vector<2x128xf32>
    %410 = arith.divf %409, %408 : vector<2x128xf32>
    %411 = vector.extract_strided_slice %410 {offsets = [0, 0], sizes = [2, 64], strides = [1, 1]} : vector<2x128xf32> to vector<2x64xf32>
    %412 = vector.extract_strided_slice %410 {offsets = [0, 64], sizes = [2, 64], strides = [1, 1]} : vector<2x128xf32> to vector<2x64xf32>
    %413 = vector.extract_strided_slice %398 {offsets = [0, 128], sizes = [2, 64], strides = [1, 1]} : vector<2x192xf32> to vector<2x64xf32>
    %414 = vector.extract_strided_slice %400 {offsets = [0, 128], sizes = [2, 64], strides = [1, 1]} : vector<2x192xf32> to vector<2x64xf32>
    %415 = arith.addf %414, %228 : vector<2x64xf32>
    %416 = arith.mulf %411, %415 : vector<2x64xf32>
    %417 = arith.addf %413, %416 : vector<2x64xf32>
    %418 = math.tanh %417 : vector<2x64xf32>
    %419 = arith.subf %393, %418 : vector<2x64xf32>
    %420 = arith.mulf %412, %419 : vector<2x64xf32>
    %421 = arith.addf %418, %420 : vector<2x64xf32>
    %422 = vector.extract_strided_slice %421 {offsets = [0, 0], sizes = [2, 32], strides = [1, 1]} : vector<2x64xf32> to vector<2x32xf32>
    %c12_128 = arith.constant 12 : index
    %c0_129 = arith.constant 0 : index
    %423 = vector.load %arg13[%c12_128, %c0_129] : memref<16x64xf32, #tpu.memory_space<vmem>>, vector<2x32xf32>
    tpu.vector_store %arg13[%c12_128, %c0_129], %422 {strides = array<i32>} : memref<16x64xf32, #tpu.memory_space<vmem>>, vector<2x32xf32>,
    %424 = vector.extract_strided_slice %421 {offsets = [0, 32], sizes = [2, 32], strides = [1, 1]} : vector<2x64xf32> to vector<2x32xf32>
    %c2_130 = arith.constant 2 : index
    %c32_131 = arith.constant 32 : index
    %425 = vector.load %arg13[%c2_130, %c32_131] : memref<16x64xf32, #tpu.memory_space<vmem>>, vector<2x32xf32>
    tpu.vector_store %arg13[%c2_130, %c32_131], %424 {strides = array<i32>} : memref<16x64xf32, #tpu.memory_space<vmem>>, vector<2x32xf32>,
    %426 = vector.extract_strided_slice %225 {offsets = [14, 0], sizes = [2, 192], strides = [1, 1]} : vector<16x192xf32> to vector<2x192xf32>
    %427 = arith.truncf %421 : vector<2x64xf32> to vector<2x64xbf16>
    %cst_132 = arith.constant dense<0.000000e+00> : vector<2x192xf32>
    %428 = tpu.matmul %427, %229, %cst_132 {dimension_numbers = #tpu.dot_dimension_numbers<[1], [0], [0], [1], [0, 0, 1, 1], [], []>} : vector<2x64xbf16>, vector<64x192xbf16>, vector<2x192xf32> -> vector<2x192xf32>
    %429 = vector.extract_strided_slice %426 {offsets = [0, 0], sizes = [2, 128], strides = [1, 1]} : vector<2x192xf32> to vector<2x128xf32>
    %430 = vector.extract_strided_slice %428 {offsets = [0, 0], sizes = [2, 128], strides = [1, 1]} : vector<2x192xf32> to vector<2x128xf32>
    %431 = arith.addf %429, %430 : vector<2x128xf32>
    %cst_133 = arith.constant 0.000000e+00 : f32
    %432 = vector.broadcast %cst_133 : f32 to vector<2x128xf32>
    %433 = arith.subf %432, %431 : vector<2x128xf32>
    %434 = math.exp %433 : vector<2x128xf32>
    %cst_134 = arith.constant 1.000000e+00 : f32
    %435 = vector.broadcast %cst_134 : f32 to vector<2x128xf32>
    %436 = arith.addf %435, %434 : vector<2x128xf32>
    %cst_135 = arith.constant 1.000000e+00 : f32
    %437 = vector.broadcast %cst_135 : f32 to vector<2x128xf32>
    %438 = arith.divf %437, %436 : vector<2x128xf32>
    %439 = vector.extract_strided_slice %438 {offsets = [0, 0], sizes = [2, 64], strides = [1, 1]} : vector<2x128xf32> to vector<2x64xf32>
    %440 = vector.extract_strided_slice %438 {offsets = [0, 64], sizes = [2, 64], strides = [1, 1]} : vector<2x128xf32> to vector<2x64xf32>
    %441 = vector.extract_strided_slice %426 {offsets = [0, 128], sizes = [2, 64], strides = [1, 1]} : vector<2x192xf32> to vector<2x64xf32>
    %442 = vector.extract_strided_slice %428 {offsets = [0, 128], sizes = [2, 64], strides = [1, 1]} : vector<2x192xf32> to vector<2x64xf32>
    %443 = arith.addf %442, %228 : vector<2x64xf32>
    %444 = arith.mulf %439, %443 : vector<2x64xf32>
    %445 = arith.addf %441, %444 : vector<2x64xf32>
    %446 = math.tanh %445 : vector<2x64xf32>
    %447 = arith.subf %421, %446 : vector<2x64xf32>
    %448 = arith.mulf %440, %447 : vector<2x64xf32>
    %449 = arith.addf %446, %448 : vector<2x64xf32>
    %450 = vector.extract_strided_slice %449 {offsets = [0, 0], sizes = [2, 32], strides = [1, 1]} : vector<2x64xf32> to vector<2x32xf32>
    %c14_136 = arith.constant 14 : index
    %c0_137 = arith.constant 0 : index
    %451 = vector.load %arg13[%c14_136, %c0_137] : memref<16x64xf32, #tpu.memory_space<vmem>>, vector<2x32xf32>
    tpu.vector_store %arg13[%c14_136, %c0_137], %450 {strides = array<i32>} : memref<16x64xf32, #tpu.memory_space<vmem>>, vector<2x32xf32>,
    %452 = vector.extract_strided_slice %449 {offsets = [0, 32], sizes = [2, 32], strides = [1, 1]} : vector<2x64xf32> to vector<2x32xf32>
    %c0_138 = arith.constant 0 : index
    %c32_139 = arith.constant 32 : index
    %453 = vector.load %arg13[%c0_138, %c32_139] : memref<16x64xf32, #tpu.memory_space<vmem>>, vector<2x32xf32>
    tpu.vector_store %arg13[%c0_138, %c32_139], %452 {strides = array<i32>} : memref<16x64xf32, #tpu.memory_space<vmem>>, vector<2x32xf32>,
    %c0_140 = arith.constant 0 : index
    %c0_141 = arith.constant 0 : index
    %454 = vector.load %arg13[%c0_140, %c0_141] : memref<16x64xf32, #tpu.memory_space<vmem>>, vector<16x64xf32>
    %455 = arith.truncf %454 : vector<16x64xf32> to vector<16x64xbf16>
    %c0_142 = arith.constant 0 : index
    %c0_143 = arith.constant 0 : index
    %456 = vector.load %arg9[%c0_142, %c0_143] : memref<64x128xbf16, #tpu.memory_space<vmem>>, vector<64x128xbf16>
    %cst_144 = arith.constant dense<0.000000e+00> : vector<16x128xf32>
    %457 = tpu.matmul %455, %456, %cst_144 {dimension_numbers = #tpu.dot_dimension_numbers<[1], [0], [0], [1], [0, 0, 1, 1], [], []>} : vector<16x64xbf16>, vector<64x128xbf16>, vector<16x128xf32> -> vector<16x128xf32>
    %c0_145 = arith.constant 0 : index
    %c0_146 = arith.constant 0 : index
    %458 = vector.load %arg10[%c0_145, %c0_146] : memref<1x128xf32, #tpu.memory_space<vmem>>, vector<1x128xf32>
    %459 = vector.broadcast %458 : vector<1x128xf32> to vector<16x128xf32>
    %460 = arith.addf %457, %459 : vector<16x128xf32>
    %c0_147 = arith.constant 0 : index
    %c0_148 = arith.constant 0 : index
    %461 = vector.load %arg11[%c0_147, %c0_148] : memref<16x128xf32, #tpu.memory_space<vmem>>, vector<16x128xf32>
    tpu.vector_store %arg11[%c0_147, %c0_148], %460 {strides = array<i32>} : memref<16x128xf32, #tpu.memory_space<vmem>>, vector<16x128xf32>,
    return
  }
}

</mosaic_0001>

<llo_original>
// kernel: bigru_crf_forward.1
$region0: #{bigru_crf_forward.1}
  #allocation0 [shape = 'u32[]', space=smem, size = 0x4, offset = 0x4, fixed_abs, tag = 'smem constant byte address 0x4 - core index']
  #allocation1 [shape = 'u32[144,128]{1,0:T(1,128)}', space=vmem, size = 0x12000, scoped, tag = 'internal scratch']
  #allocation2 [shape = 'f32[16,128]{1,0:T(8,128)}', space=vmem, size = 0x2000, scoped, tag = 'scratch operand']
  #allocation3 [shape = 'f32[16,64]{1,0:T(8,128)}', space=vmem, size = 0x2000, scoped, tag = 'scratch operand']
  %s0 = inlined_call_operand.vmem [shape: bf16[16,32], index: 0, kind: input, shape index: {}]
  %s1 = inlined_call_operand.vmem [shape: bf16[32,192], index: 1, kind: input, shape index: {}]
  %s2 = inlined_call_operand.vmem [shape: f32[1,192], index: 2, kind: input, shape index: {}]
  %s3 = inlined_call_operand.vmem [shape: f32[1,64], index: 3, kind: input, shape index: {}]
  %s4 = inlined_call_operand.vmem [shape: bf16[64,192], index: 4, kind: input, shape index: {}]
  %s5 = inlined_call_operand.vmem [shape: bf16[128,192], index: 5, kind: input, shape index: {}]
  %s6 = inlined_call_operand.vmem [shape: f32[1,192], index: 6, kind: input, shape index: {}]
  %s7 = inlined_call_operand.vmem [shape: f32[1,64], index: 7, kind: input, shape index: {}]
  %s8 = inlined_call_operand.vmem [shape: bf16[64,192], index: 8, kind: input, shape index: {}]
  %s9 = inlined_call_operand.vmem [shape: bf16[64,128], index: 9, kind: input, shape index: {}]
  %s10 = inlined_call_operand.vmem [shape: f32[1,128], index: 10, kind: input, shape index: {}]
  %s11 = inlined_call_operand.vmem [shape: f32[16,128], index: 11, kind: output, shape index: {}]
  %s12 = sld [smem:[#allocation0]]
  $region54: #{bigru_crf_forward.1} parent=0
    _
  %s14 = ssub.s32 1, %s12
  %s15 = scalar_select 0, %s14, %s12
  // Predicated region
  $region2: #{bigru_crf_forward.1} parent=0 // pred_check
    _
  $region3: #{bigru_crf_forward.1} parent=0 // pred_check_branch
    %17 = sbr.rel (0) target = $region5
  $region4: #{bigru_crf_forward.1} parent=0 // pred_region
    _
  $region5: #{bigru_crf_forward.1} parent=0 // pred_fallthru
    _
  // Predicated region
  $region6: #{bigru_crf_forward.1} parent=0 // pred_check
    _
  $region7: #{bigru_crf_forward.1} parent=0 // pred_check_branch
    %19 = sbr.rel (0) target = $region9
  $region8: #{bigru_crf_forward.1} parent=0 // pred_region
    _
  $region9: #{bigru_crf_forward.1} parent=0 // pred_fallthru
    _
  // Predicated region
  $region10: #{bigru_crf_forward.1} parent=0 // pred_check
    _
  $region11: #{bigru_crf_forward.1} parent=0 // pred_check_branch
    %21 = sbr.rel (0) target = $region13
  $region12: #{bigru_crf_forward.1} parent=0 // pred_region
    _
  $region13: #{bigru_crf_forward.1} parent=0 // pred_fallthru
    _
  // Predicated region
  $region14: #{bigru_crf_forward.1} parent=0 // pred_check
    _
  $region15: #{bigru_crf_forward.1} parent=0 // pred_check_branch
    %23 = sbr.rel (0) target = $region17
  $region16: #{bigru_crf_forward.1} parent=0 // pred_region
    _
  $region17: #{bigru_crf_forward.1} parent=0 // pred_fallthru
    _
  // Predicated region
  $region18: #{bigru_crf_forward.1} parent=0 // pred_check
    _
  $region19: #{bigru_crf_forward.1} parent=0 // pred_check_branch
    %25 = sbr.rel (0) target = $region21
  $region20: #{bigru_crf_forward.1} parent=0 // pred_region
    _
  $region21: #{bigru_crf_forward.1} parent=0 // pred_fallthru
    _
  // Predicated region
  $region22: #{bigru_crf_forward.1} parent=0 // pred_check
    _
  $region23: #{bigru_crf_forward.1} parent=0 // pred_check_branch
    %27 = sbr.rel (0) target = $region25
  $region24: #{bigru_crf_forward.1} parent=0 // pred_region
    _
  $region25: #{bigru_crf_forward.1} parent=0 // pred_fallthru
    _
  // Predicated region
  $region26: #{bigru_crf_forward.1} parent=0 // pred_check
    _
  $region27: #{bigru_crf_forward.1} parent=0 // pred_check_branch
    %29 = sbr.rel (0) target = $region29
  $region28: #{bigru_crf_forward.1} parent=0 // pred_region
    _
  $region29: #{bigru_crf_forward.1} parent=0 // pred_fallthru
    _
  // Predicated region
  $region30: #{bigru_crf_forward.1} parent=0 // pred_check
    _
  $region31: #{bigru_crf_forward.1} parent=0 // pred_check_branch
    %31 = sbr.rel (0) target = $region33
  $region32: #{bigru_crf_forward.1} parent=0 // pred_region
    _
  $region33: #{bigru_crf_forward.1} parent=0 // pred_fallthru
    _
  // Predicated region
  $region34: #{bigru_crf_forward.1} parent=0 // pred_check
    _
  $region35: #{bigru_crf_forward.1} parent=0 // pred_check_branch
    %33 = sbr.rel (0) target = $region37
  $region36: #{bigru_crf_forward.1} parent=0 // pred_region
    _
  $region37: #{bigru_crf_forward.1} parent=0 // pred_fallthru
    _
  // Predicated region
  $region38: #{bigru_crf_forward.1} parent=0 // pred_check
    _
  $region39: #{bigru_crf_forward.1} parent=0 // pred_check_branch
    %35 = sbr.rel (0) target = $region41
  $region40: #{bigru_crf_forward.1} parent=0 // pred_region
    _
  $region41: #{bigru_crf_forward.1} parent=0 // pred_fallthru
    _
  // Predicated region
  $region42: #{bigru_crf_forward.1} parent=0 // pred_check
    _
  $region43: #{bigru_crf_forward.1} parent=0 // pred_check_branch
    %37 = sbr.rel (0) target = $region45
  $region44: #{bigru_crf_forward.1} parent=0 // pred_region
    _
  $region45: #{bigru_crf_forward.1} parent=0 // pred_fallthru
    _
  %v39 = vld [vmem:[%s0] sm:$0xf]
  %v40 = vld [vmem:[%s0 + $0x4] sm:$0xf]
  %v41 = vld [vmem:[%s1] sm:$0xff]
  %v42 = vld [vmem:[%s1 + $0x8] sm:$0xff]
  %v43 = vld [vmem:[%s1 + $0x10] sm:$0xff]
  %v44 = vld [vmem:[%s1 + $0x18] sm:$0xff]
  %v45 = vld [vmem:[%s2] sm:$0x3]
  %v47 = vlaneseq
  %v48 = vshrl.u32 %v47, 7
  %v49 = vsub.s32 0, %v48
  %v50 = vrot.slane %v45, %v49
  %v51 = vlaneseq
  %v52 = vshrl.u32 %v51, 7
  %v53 = vsub.s32 1, %v52
  %v54 = vrot.slane %v45, %v53
  %v59 = vunpack.c.l.b16 %v39
  %v60 = vunpack.c.l.b16 %v40
  %v61 = vpack.c.b16 %v60, %v59
  %v66 = vunpack.c.l.b16 %v41
  %v67 = vunpack.c.h.b16 %v41
  %v68 = vunpack.c.l.b16 %v42
  %v69 = vunpack.c.h.b16 %v42
  %v70 = vunpack.c.l.b16 %v43
  %v71 = vunpack.c.h.b16 %v43
  %v72 = vunpack.c.l.b16 %v44
  %v73 = vunpack.c.h.b16 %v44
  %v74 = vpack.c.b16 %v68, %v66
  %v75 = vpack.c.b16 %v69, %v67
  %v76 = vpack.c.b16 %v72, %v70
  %v77 = vpack.c.b16 %v73, %v71
  %vm82 = vcmask 261120
  %v84 = vsel %vm82, %v61, 0
  %86 = vmatprep.subr.bf16.mxu0 %v75
  %87 = vmatpush1.bf16.msra.mxu0 %v74
  %88 = vmatprep.subr.bf16.mxu0 %v77
  %89 = vmatpush1.bf16.msra.mxu0 %v76
  %90 = vmatprep.subr.bf16.mxu0 0
  %91 = vmatpush1.bf16.msra.mxu0 0
  %92 = vmatprep.subr.bf16.mxu0 0
  %93 = vmatpush1.bf16.msra.mxu0 0
  %94 = vmatprep.subr.bf16.mxu0 0
  %95 = vmatpush1.bf16.msra.mxu0 0
  %96 = vmatprep.subr.bf16.mxu0 0
  %97 = vmatpush1.bf16.msra.mxu0 0
  %98 = vmatprep.subr.bf16.mxu0 0
  %99 = vmatpush1.bf16.msra.mxu0 0
  %100 = vmatprep.subr.bf16.mxu0 0
  %101 = vmatpush1.bf16.msra.mxu0 0
  %102 = vmatprep.subr.bf16.mxu0 0
  %103 = vmatpush1.bf16.msra.mxu0 0
  %104 = vmatprep.subr.bf16.mxu0 0
  %105 = vmatpush1.bf16.msra.mxu0 0
  %106 = vmatprep.subr.bf16.mxu0 0
  %107 = vmatpush1.bf16.msra.mxu0 0
  %108 = vmatprep.subr.bf16.mxu0 0
  %109 = vmatpush1.bf16.msra.mxu0 0
  %110 = vmatprep.subr.bf16.mxu0 0
  %111 = vmatpush1.bf16.msra.mxu0 0
  %112 = vmatprep.subr.bf16.mxu0 0
  %113 = vmatpush1.bf16.msra.mxu0 0
  %114 = vmatprep.subr.bf16.mxu0 0
  %115 = vmatpush1.bf16.msra.mxu0 0
  %116 = vmatprep.subr.bf16.mxu0 0
  %117 = vmatpush1.bf16.msra.mxu0 0
  %118 = vmatprep.mubr.bf16.mxu0 0
  %119 = vmatmul.mubr.bf16.gmra.mrb[0].mxu0 %v84
  %v120 = vpop.f32.mrb[0].mxu0
  %v121 = vadd.f32 %v50, %v120
  %v122 = vpop.f32.mrb[0].mxu0
  %v123 = vadd.f32 %v54, %v122
  %v124 = vpop.f32.mrb[0].mxu0
  %v125 = vadd.f32 %v50, %v124
  %v126 = vpop.f32.mrb[0].mxu0
  %v127 = vadd.f32 %v54, %v126
  %128 = vdwg.mxu0
  %v129 = vld [vmem:[%s3] sm:$0x1]
  %v131 = vlaneseq
  %v132 = vshrl.u32 %v131, 7
  %v133 = vsub.s32 0, %v132
  %v134 = vrot.slane %v129, %v133
  %v136 = vld [vmem:[%s4] sm:$0xff]
  %v137 = vld [vmem:[%s4 + $0x8] sm:$0xff]
  %v138 = vld [vmem:[%s4 + $0x10] sm:$0xff]
  %v139 = vld [vmem:[%s4 + $0x18] sm:$0xff]
  %v140 = vld [vmem:[%s4 + $0x20] sm:$0xff]
  %v141 = vld [vmem:[%s4 + $0x28] sm:$0xff]
  %v142 = vld [vmem:[%s4 + $0x30] sm:$0xff]
  %v143 = vld [vmem:[%s4 + $0x38] sm:$0xff]
  %v152 = vunpack.c.l.b16 %v136
  %v153 = vunpack.c.h.b16 %v136
  %v154 = vunpack.c.l.b16 %v137
  %v155 = vunpack.c.h.b16 %v137
  %v156 = vunpack.c.l.b16 %v138
  %v157 = vunpack.c.h.b16 %v138
  %v158 = vunpack.c.l.b16 %v139
  %v159 = vunpack.c.h.b16 %v139
  %v160 = vunpack.c.l.b16 %v140
  %v161 = vunpack.c.h.b16 %v140
  %v162 = vunpack.c.l.b16 %v141
  %v163 = vunpack.c.h.b16 %v141
  %v164 = vunpack.c.l.b16 %v142
  %v165 = vunpack.c.h.b16 %v142
  %v166 = vunpack.c.l.b16 %v143
  %v167 = vunpack.c.h.b16 %v143
  %v168 = vpack.c.b16 %v154, %v152
  %v169 = vpack.c.b16 %v155, %v153
  %v170 = vpack.c.b16 %v158, %v156
  %v171 = vpack.c.b16 %v159, %v157
  %v172 = vpack.c.b16 %v162, %v160
  %v173 = vpack.c.b16 %v163, %v161
  %v174 = vpack.c.b16 %v166, %v164
  %v175 = vpack.c.b16 %v167, %v165
  %vm184 = vcmask 523264
  %v186 = vsel %vm184, 0, 0
  %188 = vmatprep.subr.bf16.mxu0 %v169
  %189 = vmatpush1.bf16.msra.mxu0 %v168
  %190 = vmatprep.subr.bf16.mxu0 %v171
  %191 = vmatpush1.bf16.msra.mxu0 %v170
  %192 = vmatprep.subr.bf16.mxu0 %v173
  %193 = vmatpush1.bf16.msra.mxu0 %v172
  %194 = vmatprep.subr.bf16.mxu0 %v175
  %195 = vmatpush1.bf16.msra.mxu0 %v174
  %196 = vmatprep.subr.bf16.mxu0 0
  %197 = vmatpush1.bf16.msra.mxu0 0
  %198 = vmatprep.subr.bf16.mxu0 0
  %199 = vmatpush1.bf16.msra.mxu0 0
  %200 = vmatprep.subr.bf16.mxu0 0
  %201 = vmatpush1.bf16.msra.mxu0 0
  %202 = vmatprep.subr.bf16.mxu0 0
  %203 = vmatpush1.bf16.msra.mxu0 0
  %204 = vmatprep.subr.bf16.mxu0 0
  %205 = vmatpush1.bf16.msra.mxu0 0
  %206 = vmatprep.subr.bf16.mxu0 0
  %207 = vmatpush1.bf16.msra.mxu0 0
  %208 = vmatprep.subr.bf16.mxu0 0
  %209 = vmatpush1.bf16.msra.mxu0 0
  %210 = vmatprep.subr.bf16.mxu0 0
  %211 = vmatpush1.bf16.msra.mxu0 0
  %212 = vmatprep.subr.bf16.mxu0 0
  %213 = vmatpush1.bf16.msra.mxu0 0
  %214 = vmatprep.subr.bf16.mxu0 0
  %215 = vmatpush1.bf16.msra.mxu0 0
  %216 = vmatprep.subr.bf16.mxu0 0
  %217 = vmatpush1.bf16.msra.mxu0 0
  %218 = vmatprep.subr.bf16.mxu0 0
  %219 = vmatpush1.bf16.msra.mxu0 0
  %220 = vmatprep.mubr.bf16.mxu0 0
  %221 = vmatmul.mubr.bf16.gmra.mrb[0].mxu0 %v186
  %v222 = vpop.f32.mrb[0].mxu0
  %v223 = vadd.f32 0.0, %v222
  %v224 = vpop.f32.mrb[0].mxu0
  %v225 = vadd.f32 0.0, %v224
  %v226 = vpop.f32.mrb[0].mxu0
  %v227 = vpop.f32.mrb[0].mxu0
  %228 = vdwg.mxu0
  %v229 = vadd.f32 %v121, %v223
  %v230 = vsub.f32 0.0, %v229
  %v231 = vmul.f32 %v230, 1.442695
  %v232 = vpow.pop %v231
  %v233 = vadd.f32 %v232, 1.0
  %v234 = vrcp.pop %v233
  %v235 = vmul.f32 1.0, %v234
  %v236 = vadd.f32 %v225, %v134
  %v237 = vmul.f32 %v235, %v236
  %v238 = vadd.f32 %v123, %v237
  %v239 = vtanh.pop %v238
  %v240 = vsub.f32 0.0, %v239
  %242 = vrot.lane.b32.xlu0 %v240, 64
  %v243 = vpop.permute.xlu0 %242
  %v245 = vmul.f32 %v235, %v243
  %247 = vrot.lane.b32.xlu0 %v245, 64
  %v248 = vpop.permute.xlu0 %247
  %v250 = vadd.f32 %v239, %v248
  %vm251 = vcmask 517120
  %252 = vst.msk [vmem:[#allocation2] sm:$0x3] %vm251, %v250
  %254 = vrot.lane.b32.xlu0 %v250, 64
  %v255 = vpop.permute.xlu0 %254
  %vm257 = vcmask 1041920
  %258 = vst.msk [vmem:[#allocation2 + $0xe] sm:$0x3] %vm257, %v255
  %v259 = vpack.c.bf16 %v250, %v250
  %v261 = vsel %vm184, %v259, 0
  %263 = vmatprep.subr.bf16.mxu0 %v169
  %264 = vmatpush1.bf16.msra.mxu0 %v168
  %265 = vmatprep.subr.bf16.mxu0 %v171
  %266 = vmatpush1.bf16.msra.mxu0 %v170
  %267 = vmatprep.subr.bf16.mxu0 %v173
  %268 = vmatpush1.bf16.msra.mxu0 %v172
  %269 = vmatprep.subr.bf16.mxu0 %v175
  %270 = vmatpush1.bf16.msra.mxu0 %v174
  %271 = vmatprep.subr.bf16.mxu0 0
  %272 = vmatpush1.bf16.msra.mxu0 0
  %273 = vmatprep.subr.bf16.mxu0 0
  %274 = vmatpush1.bf16.msra.mxu0 0
  %275 = vmatprep.subr.bf16.mxu0 0
  %276 = vmatpush1.bf16.msra.mxu0 0
  %277 = vmatprep.subr.bf16.mxu0 0
  %278 = vmatpush1.bf16.msra.mxu0 0
  %279 = vmatprep.subr.bf16.mxu0 0
  %280 = vmatpush1.bf16.msra.mxu0 0
  %281 = vmatprep.subr.bf16.mxu0 0
  %282 = vmatpush1.bf16.msra.mxu0 0
  %283 = vmatprep.subr.bf16.mxu0 0
  %284 = vmatpush1.bf16.msra.mxu0 0
  %285 = vmatprep.subr.bf16.mxu0 0
  %286 = vmatpush1.bf16.msra.mxu0 0
  %287 = vmatprep.subr.bf16.mxu0 0
  %288 = vmatpush1.bf16.msra.mxu0 0
  %289 = vmatprep.subr.bf16.mxu0 0
  %290 = vmatpush1.bf16.msra.mxu0 0
  %291 = vmatprep.subr.bf16.mxu0 0
  %292 = vmatpush1.bf16.msra.mxu0 0
  %293 = vmatprep.subr.bf16.mxu0 0
  %294 = vmatpush1.bf16.msra.mxu0 0
  %295 = vmatprep.mubr.bf16.mxu0 0
  %296 = vmatmul.mubr.bf16.gmra.mrb[0].mxu0 %v261
  %v297 = vpop.f32.mrb[0].mxu0
  %v298 = vadd.f32 0.0, %v297
  %v299 = vpop.f32.mrb[0].mxu0
  %v300 = vadd.f32 0.0, %v299
  %v301 = vpop.f32.mrb[0].mxu0
  %v302 = vpop.f32.mrb[0].mxu0
  %303 = vdwg.mxu0
  %v305 = vrot.slane %v298, 6
  %v307 = vadd.f32 %v121, %v305
  %v308 = vsub.f32 0.0, %v307
  %v309 = vmul.f32 %v308, 1.442695
  %v310 = vpow.pop %v309
  %v311 = vadd.f32 %v310, 1.0
  %v312 = vrcp.pop %v311
  %v313 = vmul.f32 1.0, %v312
  %v314 = vadd.f32 %v300, %v134
  %v316 = vrot.slane %v314, 6
  %v318 = vmul.f32 %v313, %v316
  %v319 = vadd.f32 %v123, %v318
  %v320 = vtanh.pop %v319
  %v322 = vrot.slane %v320, 2
  %v324 = vsub.f32 %v250, %v322
  %v326 = vrot.slane %v324, 6
  %327 = vrot.lane.b32.xlu0 %v326, 64
  %v328 = vpop.permute.xlu0 %327
  %v330 = vmul.f32 %v313, %v328
  %332 = vrot.lane.b32.xlu0 %v330, 64
  %v333 = vpop.permute.xlu0 %332
  %v335 = vadd.f32 %v320, %v333
  %vm336 = vcmask 519170
  %337 = vst.msk [vmem:[#allocation2] sm:$0xc] %vm336, %v335
  %339 = vrot.lane.b32.xlu0 %v335, 64
  %v340 = vpop.permute.xlu0 %339
  %vm342 = vcmask 1043970
  %343 = vst.msk [vmem:[#allocation2 + $0xa] sm:$0xc] %vm342, %v340
  %v344 = vpack.c.bf16 %v335, %v335
  %v346 = vrot.slane %v344, 1
  %v348 = vsel %vm184, %v346, 0
  %350 = vmatprep.subr.bf16.mxu0 %v169
  %351 = vmatpush1.bf16.msra.mxu0 %v168
  %352 = vmatprep.subr.bf16.mxu0 %v171
  %353 = vmatpush1.bf16.msra.mxu0 %v170
  %354 = vmatprep.subr.bf16.mxu0 %v173
  %355 = vmatpush1.bf16.msra.mxu0 %v172
  %356 = vmatprep.subr.bf16.mxu0 %v175
  %357 = vmatpush1.bf16.msra.mxu0 %v174
  %358 = vmatprep.subr.bf16.mxu0 0
  %359 = vmatpush1.bf16.msra.mxu0 0
  %360 = vmatprep.subr.bf16.mxu0 0
  %361 = vmatpush1.bf16.msra.mxu0 0
  %362 = vmatprep.subr.bf16.mxu0 0
  %363 = vmatpush1.bf16.msra.mxu0 0
  %364 = vmatprep.subr.bf16.mxu0 0
  %365 = vmatpush1.bf16.msra.mxu0 0
  %366 = vmatprep.subr.bf16.mxu0 0
  %367 = vmatpush1.bf16.msra.mxu0 0
  %368 = vmatprep.subr.bf16.mxu0 0
  %369 = vmatpush1.bf16.msra.mxu0 0
  %370 = vmatprep.subr.bf16.mxu0 0
  %371 = vmatpush1.bf16.msra.mxu0 0
  %372 = vmatprep.subr.bf16.mxu0 0
  %373 = vmatpush1.bf16.msra.mxu0 0
  %374 = vmatprep.subr.bf16.mxu0 0
  %375 = vmatpush1.bf16.msra.mxu0 0
  %376 = vmatprep.subr.bf16.mxu0 0
  %377 = vmatpush1.bf16.msra.mxu0 0
  %378 = vmatprep.subr.bf16.mxu0 0
  %379 = vmatpush1.bf16.msra.mxu0 0
  %380 = vmatprep.subr.bf16.mxu0 0
  %381 = vmatpush1.bf16.msra.mxu0 0
  %382 = vmatprep.mubr.bf16.mxu0 0
  %383 = vmatmul.mubr.bf16.gmra.mrb[0].mxu0 %v348
  %v384 = vpop.f32.mrb[0].mxu0
  %v385 = vadd.f32 0.0, %v384
  %v386 = vpop.f32.mrb[0].mxu0
  %v387 = vadd.f32 0.0, %v386
  %v388 = vpop.f32.mrb[0].mxu0
  %v389 = vpop.f32.mrb[0].mxu0
  %390 = vdwg.mxu0
  %v392 = vrot.slane %v385, 4
  %v394 = vadd.f32 %v121, %v392
  %v395 = vsub.f32 0.0, %v394
  %v396 = vmul.f32 %v395, 1.442695
  %v397 = vpow.pop %v396
  %v398 = vadd.f32 %v397, 1.0
  %v399 = vrcp.pop %v398
  %v400 = vmul.f32 1.0, %v399
  %v401 = vadd.f32 %v387, %v134
  %v403 = vrot.slane %v401, 4
  %v405 = vmul.f32 %v400, %v403
  %v406 = vadd.f32 %v123, %v405
  %v407 = vtanh.pop %v406
  %v409 = vrot.slane %v407, 2
  %v411 = vsub.f32 %v335, %v409
  %v413 = vrot.slane %v411, 6
  %414 = vrot.lane.b32.xlu0 %v413, 64
  %v415 = vpop.permute.xlu0 %414
  %v417 = vmul.f32 %v400, %v415
  %419 = vrot.lane.b32.xlu0 %v417, 64
  %v420 = vpop.permute.xlu0 %419
  %v422 = vadd.f32 %v407, %v420
  %vm423 = vcmask 521220
  %424 = vst.msk [vmem:[#allocation2] sm:$0x30] %vm423, %v422
  %426 = vrot.lane.b32.xlu0 %v422, 64
  %v427 = vpop.permute.xlu0 %426
  %vm429 = vcmask 1046020
  %430 = vst.msk [vmem:[#allocation2 + $0x6] sm:$0x30] %vm429, %v427
  %v431 = vpack.c.bf16 %v422, %v422
  %v433 = vrot.slane %v431, 2
  %v435 = vsel %vm184, %v433, 0
  %437 = vmatprep.subr.bf16.mxu0 %v169
  %438 = vmatpush1.bf16.msra.mxu0 %v168
  %439 = vmatprep.subr.bf16.mxu0 %v171
  %440 = vmatpush1.bf16.msra.mxu0 %v170
  %441 = vmatprep.subr.bf16.mxu0 %v173
  %442 = vmatpush1.bf16.msra.mxu0 %v172
  %443 = vmatprep.subr.bf16.mxu0 %v175
  %444 = vmatpush1.bf16.msra.mxu0 %v174
  %445 = vmatprep.subr.bf16.mxu0 0
  %446 = vmatpush1.bf16.msra.mxu0 0
  %447 = vmatprep.subr.bf16.mxu0 0
  %448 = vmatpush1.bf16.msra.mxu0 0
  %449 = vmatprep.subr.bf16.mxu0 0
  %450 = vmatpush1.bf16.msra.mxu0 0
  %451 = vmatprep.subr.bf16.mxu0 0
  %452 = vmatpush1.bf16.msra.mxu0 0
  %453 = vmatprep.subr.bf16.mxu0 0
  %454 = vmatpush1.bf16.msra.mxu0 0
  %455 = vmatprep.subr.bf16.mxu0 0
  %456 = vmatpush1.bf16.msra.mxu0 0
  %457 = vmatprep.subr.bf16.mxu0 0
  %458 = vmatpush1.bf16.msra.mxu0 0
  %459 = vmatprep.subr.bf16.mxu0 0
  %460 = vmatpush1.bf16.msra.mxu0 0
  %461 = vmatprep.subr.bf16.mxu0 0
  %462 = vmatpush1.bf16.msra.mxu0 0
  %463 = vmatprep.subr.bf16.mxu0 0
  %464 = vmatpush1.bf16.msra.mxu0 0
  %465 = vmatprep.subr.bf16.mxu0 0
  %466 = vmatpush1.bf16.msra.mxu0 0
  %467 = vmatprep.subr.bf16.mxu0 0
  %468 = vmatpush1.bf16.msra.mxu0 0
  %469 = vmatprep.mubr.bf16.mxu0 0
  %470 = vmatmul.mubr.bf16.gmra.mrb[0].mxu0 %v435
  %v471 = vpop.f32.mrb[0].mxu0
  %v472 = vadd.f32 0.0, %v471
  %v473 = vpop.f32.mrb[0].mxu0
  %v474 = vadd.f32 0.0, %v473
  %v475 = vpop.f32.mrb[0].mxu0
  %v476 = vpop.f32.mrb[0].mxu0
  %477 = vdwg.mxu0
  %v479 = vrot.slane %v472, 2
  %v481 = vadd.f32 %v121, %v479
  %v482 = vsub.f32 0.0, %v481
  %v483 = vmul.f32 %v482, 1.442695
  %v484 = vpow.pop %v483
  %v485 = vadd.f32 %v484, 1.0
  %v486 = vrcp.pop %v485
  %v487 = vmul.f32 1.0, %v486
  %v488 = vadd.f32 %v474, %v134
  %v490 = vrot.slane %v488, 2
  %v492 = vmul.f32 %v487, %v490
  %v493 = vadd.f32 %v123, %v492
  %v494 = vtanh.pop %v493
  %v496 = vrot.slane %v494, 2
  %v498 = vsub.f32 %v422, %v496
  %v500 = vrot.slane %v498, 6
  %501 = vrot.lane.b32.xlu0 %v500, 64
  %v502 = vpop.permute.xlu0 %501
  %v504 = vmul.f32 %v487, %v502
  %506 = vrot.lane.b32.xlu0 %v504, 64
  %v507 = vpop.permute.xlu0 %506
  %v509 = vadd.f32 %v494, %v507
  %vm510 = vcmask 523270
  %511 = vst.msk [vmem:[#allocation2] sm:$0xc0] %vm510, %v509
  %513 = vrot.lane.b32.xlu0 %v509, 64
  %v514 = vpop.permute.xlu0 %513
  %vm516 = vcmask 1048070
  %517 = vst.msk [vmem:[#allocation2 + $0x2] sm:$0xc0] %vm516, %v514
  %v518 = vpack.c.bf16 %v509, %v509
  %v520 = vrot.slane %v518, 3
  %v522 = vsel %vm184, %v520, 0
  %524 = vmatprep.subr.bf16.mxu0 %v169
  %525 = vmatpush1.bf16.msra.mxu0 %v168
  %526 = vmatprep.subr.bf16.mxu0 %v171
  %527 = vmatpush1.bf16.msra.mxu0 %v170
  %528 = vmatprep.subr.bf16.mxu0 %v173
  %529 = vmatpush1.bf16.msra.mxu0 %v172
  %530 = vmatprep.subr.bf16.mxu0 %v175
  %531 = vmatpush1.bf16.msra.mxu0 %v174
  %532 = vmatprep.subr.bf16.mxu0 0
  %533 = vmatpush1.bf16.msra.mxu0 0
  %534 = vmatprep.subr.bf16.mxu0 0
  %535 = vmatpush1.bf16.msra.mxu0 0
  %536 = vmatprep.subr.bf16.mxu0 0
  %537 = vmatpush1.bf16.msra.mxu0 0
  %538 = vmatprep.subr.bf16.mxu0 0
  %539 = vmatpush1.bf16.msra.mxu0 0
  %540 = vmatprep.subr.bf16.mxu0 0
  %541 = vmatpush1.bf16.msra.mxu0 0
  %542 = vmatprep.subr.bf16.mxu0 0
  %543 = vmatpush1.bf16.msra.mxu0 0
  %544 = vmatprep.subr.bf16.mxu0 0
  %545 = vmatpush1.bf16.msra.mxu0 0
  %546 = vmatprep.subr.bf16.mxu0 0
  %547 = vmatpush1.bf16.msra.mxu0 0
  %548 = vmatprep.subr.bf16.mxu0 0
  %549 = vmatpush1.bf16.msra.mxu0 0
  %550 = vmatprep.subr.bf16.mxu0 0
  %551 = vmatpush1.bf16.msra.mxu0 0
  %552 = vmatprep.subr.bf16.mxu0 0
  %553 = vmatpush1.bf16.msra.mxu0 0
  %554 = vmatprep.subr.bf16.mxu0 0
  %555 = vmatpush1.bf16.msra.mxu0 0
  %556 = vmatprep.mubr.bf16.mxu0 0
  %557 = vmatmul.mubr.bf16.gmra.mrb[0].mxu0 %v522
  %v558 = vpop.f32.mrb[0].mxu0
  %v559 = vadd.f32 0.0, %v558
  %v560 = vpop.f32.mrb[0].mxu0
  %v561 = vadd.f32 0.0, %v560
  %v562 = vpop.f32.mrb[0].mxu0
  %v563 = vpop.f32.mrb[0].mxu0
  %564 = vdwg.mxu0
  %v565 = vadd.f32 %v125, %v559
  %v566 = vsub.f32 0.0, %v565
  %v567 = vmul.f32 %v566, 1.442695
  %v568 = vpow.pop %v567
  %v569 = vadd.f32 %v568, 1.0
  %v570 = vrcp.pop %v569
  %v571 = vmul.f32 1.0, %v570
  %v572 = vadd.f32 %v561, %v134
  %v573 = vmul.f32 %v571, %v572
  %v574 = vadd.f32 %v127, %v573
  %v575 = vtanh.pop %v574
  %v577 = vrot.slane %v575, 2
  %v579 = vsub.f32 %v509, %v577
  %v581 = vrot.slane %v579, 6
  %582 = vrot.lane.b32.xlu0 %v581, 64
  %v583 = vpop.permute.xlu0 %582
  %v585 = vmul.f32 %v571, %v583
  %587 = vrot.lane.b32.xlu0 %v585, 64
  %v588 = vpop.permute.xlu0 %587
  %v590 = vadd.f32 %v575, %v588
  %591 = vst.msk [vmem:[#allocation2 + $0x8] sm:$0x3] %vm251, %v590
  %593 = vrot.lane.b32.xlu0 %v590, 64
  %v594 = vpop.permute.xlu0 %593
  %596 = vst.msk [vmem:[#allocation2 + $0x6] sm:$0x3] %vm257, %v594
  %v597 = vpack.c.bf16 %v590, %v590
  %v599 = vsel %vm184, %v597, 0
  %601 = vmatprep.subr.bf16.mxu0 %v169
  %602 = vmatpush1.bf16.msra.mxu0 %v168
  %603 = vmatprep.subr.bf16.mxu0 %v171
  %604 = vmatpush1.bf16.msra.mxu0 %v170
  %605 = vmatprep.subr.bf16.mxu0 %v173
  %606 = vmatpush1.bf16.msra.mxu0 %v172
  %607 = vmatprep.subr.bf16.mxu0 %v175
  %608 = vmatpush1.bf16.msra.mxu0 %v174
  %609 = vmatprep.subr.bf16.mxu0 0
  %610 = vmatpush1.bf16.msra.mxu0 0
  %611 = vmatprep.subr.bf16.mxu0 0
  %612 = vmatpush1.bf16.msra.mxu0 0
  %613 = vmatprep.subr.bf16.mxu0 0
  %614 = vmatpush1.bf16.msra.mxu0 0
  %615 = vmatprep.subr.bf16.mxu0 0
  %616 = vmatpush1.bf16.msra.mxu0 0
  %617 = vmatprep.subr.bf16.mxu0 0
  %618 = vmatpush1.bf16.msra.mxu0 0
  %619 = vmatprep.subr.bf16.mxu0 0
  %620 = vmatpush1.bf16.msra.mxu0 0
  %621 = vmatprep.subr.bf16.mxu0 0
  %622 = vmatpush1.bf16.msra.mxu0 0
  %623 = vmatprep.subr.bf16.mxu0 0
  %624 = vmatpush1.bf16.msra.mxu0 0
  %625 = vmatprep.subr.bf16.mxu0 0
  %626 = vmatpush1.bf16.msra.mxu0 0
  %627 = vmatprep.subr.bf16.mxu0 0
  %628 = vmatpush1.bf16.msra.mxu0 0
  %629 = vmatprep.subr.bf16.mxu0 0
  %630 = vmatpush1.bf16.msra.mxu0 0
  %631 = vmatprep.subr.bf16.mxu0 0
  %632 = vmatpush1.bf16.msra.mxu0 0
  %633 = vmatprep.mubr.bf16.mxu0 0
  %634 = vmatmul.mubr.bf16.gmra.mrb[0].mxu0 %v599
  %v635 = vpop.f32.mrb[0].mxu0
  %v636 = vadd.f32 0.0, %v635
  %v637 = vpop.f32.mrb[0].mxu0
  %v638 = vadd.f32 0.0, %v637
  %v639 = vpop.f32.mrb[0].mxu0
  %v640 = vpop.f32.mrb[0].mxu0
  %641 = vdwg.mxu0
  %v643 = vrot.slane %v636, 6
  %v645 = vadd.f32 %v125, %v643
  %v646 = vsub.f32 0.0, %v645
  %v647 = vmul.f32 %v646, 1.442695
  %v648 = vpow.pop %v647
  %v649 = vadd.f32 %v648, 1.0
  %v650 = vrcp.pop %v649
  %v651 = vmul.f32 1.0, %v650
  %v652 = vadd.f32 %v638, %v134
  %v654 = vrot.slane %v652, 6
  %v656 = vmul.f32 %v651, %v654
  %v657 = vadd.f32 %v127, %v656
  %v658 = vtanh.pop %v657
  %v660 = vrot.slane %v658, 2
  %v662 = vsub.f32 %v590, %v660
  %v664 = vrot.slane %v662, 6
  %665 = vrot.lane.b32.xlu0 %v664, 64
  %v666 = vpop.permute.xlu0 %665
  %v668 = vmul.f32 %v651, %v666
  %670 = vrot.lane.b32.xlu0 %v668, 64
  %v671 = vpop.permute.xlu0 %670
  %v673 = vadd.f32 %v658, %v671
  %674 = vst.msk [vmem:[#allocation2 + $0x8] sm:$0xc] %vm336, %v673
  %676 = vrot.lane.b32.xlu0 %v673, 64
  %v677 = vpop.permute.xlu0 %676
  %679 = vst.msk [vmem:[#allocation2 + $0x2] sm:$0xc] %vm342, %v677
  %v680 = vpack.c.bf16 %v673, %v673
  %v682 = vrot.slane %v680, 1
  %v684 = vsel %vm184, %v682, 0
  %686 = vmatprep.subr.bf16.mxu0 %v169
  %687 = vmatpush1.bf16.msra.mxu0 %v168
  %688 = vmatprep.subr.bf16.mxu0 %v171
  %689 = vmatpush1.bf16.msra.mxu0 %v170
  %690 = vmatprep.subr.bf16.mxu0 %v173
  %691 = vmatpush1.bf16.msra.mxu0 %v172
  %692 = vmatprep.subr.bf16.mxu0 %v175
  %693 = vmatpush1.bf16.msra.mxu0 %v174
  %694 = vmatprep.subr.bf16.mxu0 0
  %695 = vmatpush1.bf16.msra.mxu0 0
  %696 = vmatprep.subr.bf16.mxu0 0
  %697 = vmatpush1.bf16.msra.mxu0 0
  %698 = vmatprep.subr.bf16.mxu0 0
  %699 = vmatpush1.bf16.msra.mxu0 0
  %700 = vmatprep.subr.bf16.mxu0 0
  %701 = vmatpush1.bf16.msra.mxu0 0
  %702 = vmatprep.subr.bf16.mxu0 0
  %703 = vmatpush1.bf16.msra.mxu0 0
  %704 = vmatprep.subr.bf16.mxu0 0
  %705 = vmatpush1.bf16.msra.mxu0 0
  %706 = vmatprep.subr.bf16.mxu0 0
  %707 = vmatpush1.bf16.msra.mxu0 0
  %708 = vmatprep.subr.bf16.mxu0 0
  %709 = vmatpush1.bf16.msra.mxu0 0
  %710 = vmatprep.subr.bf16.mxu0 0
  %711 = vmatpush1.bf16.msra.mxu0 0
  %712 = vmatprep.subr.bf16.mxu0 0
  %713 = vmatpush1.bf16.msra.mxu0 0
  %714 = vmatprep.subr.bf16.mxu0 0
  %715 = vmatpush1.bf16.msra.mxu0 0
  %716 = vmatprep.subr.bf16.mxu0 0
  %717 = vmatpush1.bf16.msra.mxu0 0
  %718 = vmatprep.mubr.bf16.mxu0 0
  %719 = vmatmul.mubr.bf16.gmra.mrb[0].mxu0 %v684
  %v720 = vpop.f32.mrb[0].mxu0
  %v721 = vadd.f32 0.0, %v720
  %v722 = vpop.f32.mrb[0].mxu0
  %v723 = vadd.f32 0.0, %v722
  %v724 = vpop.f32.mrb[0].mxu0
  %v725 = vpop.f32.mrb[0].mxu0
  %726 = vdwg.mxu0
  %v728 = vrot.slane %v721, 4
  %v730 = vadd.f32 %v125, %v728
  %v731 = vsub.f32 0.0, %v730
  %v732 = vmul.f32 %v731, 1.442695
  %v733 = vpow.pop %v732
  %v734 = vadd.f32 %v733, 1.0
  %v735 = vrcp.pop %v734
  %v736 = vmul.f32 1.0, %v735
  %v737 = vadd.f32 %v723, %v134
  %v739 = vrot.slane %v737, 4
  %v741 = vmul.f32 %v736, %v739
  %v742 = vadd.f32 %v127, %v741
  %v743 = vtanh.pop %v742
  %v745 = vrot.slane %v743, 2
  %v747 = vsub.f32 %v673, %v745
  %v749 = vrot.slane %v747, 6
  %750 = vrot.lane.b32.xlu0 %v749, 64
  %v751 = vpop.permute.xlu0 %750
  %v753 = vmul.f32 %v736, %v751
  %755 = vrot.lane.b32.xlu0 %v753, 64
  %v756 = vpop.permute.xlu0 %755
  %v758 = vadd.f32 %v743, %v756
  %759 = vst.msk [vmem:[#allocation2 + $0x8] sm:$0x30] %vm423, %v758
  %761 = vrot.lane.b32.xlu0 %v758, 64
  %v762 = vpop.permute.xlu0 %761
  %764 = vst.msk [vmem:[#allocation2 - $0x2] sm:$0x30] %vm429, %v762
  %v765 = vpack.c.bf16 %v758, %v758
  %v767 = vrot.slane %v765, 2
  %v769 = vsel %vm184, %v767, 0
  %771 = vmatprep.subr.bf16.mxu0 %v169
  %772 = vmatpush1.bf16.msra.mxu0 %v168
  %773 = vmatprep.subr.bf16.mxu0 %v171
  %774 = vmatpush1.bf16.msra.mxu0 %v170
  %775 = vmatprep.subr.bf16.mxu0 %v173
  %776 = vmatpush1.bf16.msra.mxu0 %v172
  %777 = vmatprep.subr.bf16.mxu0 %v175
  %778 = vmatpush1.bf16.msra.mxu0 %v174
  %779 = vmatprep.subr.bf16.mxu0 0
  %780 = vmatpush1.bf16.msra.mxu0 0
  %781 = vmatprep.subr.bf16.mxu0 0
  %782 = vmatpush1.bf16.msra.mxu0 0
  %783 = vmatprep.subr.bf16.mxu0 0
  %784 = vmatpush1.bf16.msra.mxu0 0
  %785 = vmatprep.subr.bf16.mxu0 0
  %786 = vmatpush1.bf16.msra.mxu0 0
  %787 = vmatprep.subr.bf16.mxu0 0
  %788 = vmatpush1.bf16.msra.mxu0 0
  %789 = vmatprep.subr.bf16.mxu0 0
  %790 = vmatpush1.bf16.msra.mxu0 0
  %791 = vmatprep.subr.bf16.mxu0 0
  %792 = vmatpush1.bf16.msra.mxu0 0
  %793 = vmatprep.subr.bf16.mxu0 0
  %794 = vmatpush1.bf16.msra.mxu0 0
  %795 = vmatprep.subr.bf16.mxu0 0
  %796 = vmatpush1.bf16.msra.mxu0 0
  %797 = vmatprep.subr.bf16.mxu0 0
  %798 = vmatpush1.bf16.msra.mxu0 0
  %799 = vmatprep.subr.bf16.mxu0 0
  %800 = vmatpush1.bf16.msra.mxu0 0
  %801 = vmatprep.subr.bf16.mxu0 0
  %802 = vmatpush1.bf16.msra.mxu0 0
  %803 = vmatprep.mubr.bf16.mxu0 0
  %804 = vmatmul.mubr.bf16.gmra.mrb[0].mxu0 %v769
  %v805 = vpop.f32.mrb[0].mxu0
  %v806 = vadd.f32 0.0, %v805
  %v807 = vpop.f32.mrb[0].mxu0
  %v808 = vadd.f32 0.0, %v807
  %v809 = vpop.f32.mrb[0].mxu0
  %v810 = vpop.f32.mrb[0].mxu0
  %811 = vdwg.mxu0
  %v813 = vrot.slane %v806, 2
  %v815 = vadd.f32 %v125, %v813
  %v816 = vsub.f32 0.0, %v815
  %v817 = vmul.f32 %v816, 1.442695
  %v818 = vpow.pop %v817
  %v819 = vadd.f32 %v818, 1.0
  %v820 = vrcp.pop %v819
  %v821 = vmul.f32 1.0, %v820
  %v822 = vadd.f32 %v808, %v134
  %v824 = vrot.slane %v822, 2
  %v826 = vmul.f32 %v821, %v824
  %v827 = vadd.f32 %v127, %v826
  %v828 = vtanh.pop %v827
  %v830 = vrot.slane %v828, 2
  %v832 = vsub.f32 %v758, %v830
  %v834 = vrot.slane %v832, 6
  %835 = vrot.lane.b32.xlu0 %v834, 64
  %v836 = vpop.permute.xlu0 %835
  %v838 = vmul.f32 %v821, %v836
  %840 = vrot.lane.b32.xlu0 %v838, 64
  %v841 = vpop.permute.xlu0 %840
  %v843 = vadd.f32 %v828, %v841
  %844 = vst.msk [vmem:[#allocation2 + $0x8] sm:$0xc0] %vm510, %v843
  %846 = vrot.lane.b32.xlu0 %v843, 64
  %v847 = vpop.permute.xlu0 %846
  %849 = vst.msk [vmem:[#allocation2 - $0x6] sm:$0xc0] %vm516, %v847
  %v850 = vld [vmem:[#allocation2] sm:$0xff]
  %v851 = vld [vmem:[#allocation2 + $0x8] sm:$0xff]
  %v852 = vpack.c.bf16 %v851, %v850
  %v853 = vld [vmem:[%s5] sm:$0xff]
  %v854 = vld [vmem:[%s5 + $0x8] sm:$0xff]
  %v855 = vld [vmem:[%s5 + $0x10] sm:$0xff]
  %v856 = vld [vmem:[%s5 + $0x18] sm:$0xff]
  %v857 = vld [vmem:[%s5 + $0x20] sm:$0xff]
  %v858 = vld [vmem:[%s5 + $0x28] sm:$0xff]
  %v859 = vld [vmem:[%s5 + $0x30] sm:$0xff]
  %v860 = vld [vmem:[%s5 + $0x38] sm:$0xff]
  %v861 = vld [vmem:[%s5 + $0x40] sm:$0xff]
  %v862 = vld [vmem:[%s5 + $0x48] sm:$0xff]
  %v863 = vld [vmem:[%s5 + $0x50] sm:$0xff]
  %v864 = vld [vmem:[%s5 + $0x58] sm:$0xff]
  %v865 = vld [vmem:[%s5 + $0x60] sm:$0xff]
  %v866 = vld [vmem:[%s5 + $0x68] sm:$0xff]
  %v867 = vld [vmem:[%s5 + $0x70] sm:$0xff]
  %v868 = vld [vmem:[%s5 + $0x78] sm:$0xff]
  %v869 = vld [vmem:[%s6] sm:$0x3]
  %v871 = vlaneseq
  %v872 = vshrl.u32 %v871, 7
  %v873 = vsub.s32 0, %v872
  %v874 = vrot.slane %v869, %v873
  %v875 = vlaneseq
  %v876 = vshrl.u32 %v875, 7
  %v877 = vsub.s32 1, %v876
  %v878 = vrot.slane %v869, %v877
  %v897 = vunpack.c.l.b16 %v853
  %v898 = vunpack.c.h.b16 %v853
  %v899 = vunpack.c.l.b16 %v854
  %v900 = vunpack.c.h.b16 %v854
  %v901 = vunpack.c.l.b16 %v855
  %v902 = vunpack.c.h.b16 %v855
  %v903 = vunpack.c.l.b16 %v856
  %v904 = vunpack.c.h.b16 %v856
  %v905 = vunpack.c.l.b16 %v857
  %v906 = vunpack.c.h.b16 %v857
  %v907 = vunpack.c.l.b16 %v858
  %v908 = vunpack.c.h.b16 %v858
  %v909 = vunpack.c.l.b16 %v859
  %v910 = vunpack.c.h.b16 %v859
  %v911 = vunpack.c.l.b16 %v860
  %v912 = vunpack.c.h.b16 %v860
  %v913 = vunpack.c.l.b16 %v861
  %v914 = vunpack.c.h.b16 %v861
  %v915 = vunpack.c.l.b16 %v862
  %v916 = vunpack.c.h.b16 %v862
  %v917 = vunpack.c.l.b16 %v863
  %v918 = vunpack.c.h.b16 %v863
  %v919 = vunpack.c.l.b16 %v864
  %v920 = vunpack.c.h.b16 %v864
  %v921 = vunpack.c.l.b16 %v865
  %v922 = vunpack.c.h.b16 %v865
  %v923 = vunpack.c.l.b16 %v866
  %v924 = vunpack.c.h.b16 %v866
  %v925 = vunpack.c.l.b16 %v867
  %v926 = vunpack.c.h.b16 %v867
  %v927 = vunpack.c.l.b16 %v868
  %v928 = vunpack.c.h.b16 %v868
  %v929 = vpack.c.b16 %v899, %v897
  %v930 = vpack.c.b16 %v900, %v898
  %v931 = vpack.c.b16 %v903, %v901
  %v932 = vpack.c.b16 %v904, %v902
  %v933 = vpack.c.b16 %v907, %v905
  %v934 = vpack.c.b16 %v908, %v906
  %v935 = vpack.c.b16 %v911, %v909
  %v936 = vpack.c.b16 %v912, %v910
  %v937 = vpack.c.b16 %v915, %v913
  %v938 = vpack.c.b16 %v916, %v914
  %v939 = vpack.c.b16 %v919, %v917
  %v940 = vpack.c.b16 %v920, %v918
  %v941 = vpack.c.b16 %v923, %v921
  %v942 = vpack.c.b16 %v924, %v922
  %v943 = vpack.c.b16 %v927, %v925
  %v944 = vpack.c.b16 %v928, %v926
  %961 = vmatprep.subr.bf16.mxu0 %v930
  %962 = vmatpush1.bf16.msra.mxu0 %v929
  %963 = vmatprep.subr.bf16.mxu0 %v932
  %964 = vmatpush1.bf16.msra.mxu0 %v931
  %965 = vmatprep.subr.bf16.mxu0 %v934
  %966 = vmatpush1.bf16.msra.mxu0 %v933
  %967 = vmatprep.subr.bf16.mxu0 %v936
  %968 = vmatpush1.bf16.msra.mxu0 %v935
  %969 = vmatprep.subr.bf16.mxu0 %v938
  %970 = vmatpush1.bf16.msra.mxu0 %v937
  %971 = vmatprep.subr.bf16.mxu0 %v940
  %972 = vmatpush1.bf16.msra.mxu0 %v939
  %973 = vmatprep.subr.bf16.mxu0 %v942
  %974 = vmatpush1.bf16.msra.mxu0 %v941
  %975 = vmatprep.subr.bf16.mxu0 %v944
  %976 = vmatpush1.bf16.msra.mxu0 %v943
  %977 = vmatprep.subr.bf16.mxu0 0
  %978 = vmatpush1.bf16.msra.mxu0 0
  %979 = vmatprep.subr.bf16.mxu0 0
  %980 = vmatpush1.bf16.msra.mxu0 0
  %981 = vmatprep.subr.bf16.mxu0 0
  %982 = vmatpush1.bf16.msra.mxu0 0
  %983 = vmatprep.subr.bf16.mxu0 0
  %984 = vmatpush1.bf16.msra.mxu0 0
  %985 = vmatprep.subr.bf16.mxu0 0
  %986 = vmatpush1.bf16.msra.mxu0 0
  %987 = vmatprep.subr.bf16.mxu0 0
  %988 = vmatpush1.bf16.msra.mxu0 0
  %989 = vmatprep.subr.bf16.mxu0 0
  %990 = vmatpush1.bf16.msra.mxu0 0
  %991 = vmatprep.subr.bf16.mxu0 0
  %992 = vmatpush1.bf16.msra.mxu0 0
  %993 = vmatprep.mubr.bf16.mxu0 0
  %994 = vmatmul.mubr.bf16.gmra.mrb[0].mxu0 %v852
  %v995 = vpop.f32.mrb[0].mxu0
  %v996 = vadd.f32 %v874, %v995
  %v997 = vpop.f32.mrb[0].mxu0
  %v998 = vadd.f32 %v878, %v997
  %v999 = vpop.f32.mrb[0].mxu0
  %v1000 = vadd.f32 %v874, %v999
  %v1001 = vpop.f32.mrb[0].mxu0
  %v1002 = vadd.f32 %v878, %v1001
  %1003 = vdwg.mxu0
  %v1004 = vld [vmem:[%s7] sm:$0x1]
  %v1006 = vlaneseq
  %v1007 = vshrl.u32 %v1006, 7
  %v1008 = vsub.s32 0, %v1007
  %v1009 = vrot.slane %v1004, %v1008
  %v1011 = vld [vmem:[%s8] sm:$0xff]
  %v1012 = vld [vmem:[%s8 + $0x8] sm:$0xff]
  %v1013 = vld [vmem:[%s8 + $0x10] sm:$0xff]
  %v1014 = vld [vmem:[%s8 + $0x18] sm:$0xff]
  %v1015 = vld [vmem:[%s8 + $0x20] sm:$0xff]
  %v1016 = vld [vmem:[%s8 + $0x28] sm:$0xff]
  %v1017 = vld [vmem:[%s8 + $0x30] sm:$0xff]
  %v1018 = vld [vmem:[%s8 + $0x38] sm:$0xff]
  %v1019 = vpack.c.bf16 %v843, %v843
  %v1021 = vrot.slane %v1019, 3
  %v1030 = vunpack.c.l.b16 %v1011
  %v1031 = vunpack.c.h.b16 %v1011
  %v1032 = vunpack.c.l.b16 %v1012
  %v1033 = vunpack.c.h.b16 %v1012
  %v1034 = vunpack.c.l.b16 %v1013
  %v1035 = vunpack.c.h.b16 %v1013
  %v1036 = vunpack.c.l.b16 %v1014
  %v1037 = vunpack.c.h.b16 %v1014
  %v1038 = vunpack.c.l.b16 %v1015
  %v1039 = vunpack.c.h.b16 %v1015
  %v1040 = vunpack.c.l.b16 %v1016
  %v1041 = vunpack.c.h.b16 %v1016
  %v1042 = vunpack.c.l.b16 %v1017
  %v1043 = vunpack.c.h.b16 %v1017
  %v1044 = vunpack.c.l.b16 %v1018
  %v1045 = vunpack.c.h.b16 %v1018
  %v1046 = vpack.c.b16 %v1032, %v1030
  %v1047 = vpack.c.b16 %v1033, %v1031
  %v1048 = vpack.c.b16 %v1036, %v1034
  %v1049 = vpack.c.b16 %v1037, %v1035
  %v1050 = vpack.c.b16 %v1040, %v1038
  %v1051 = vpack.c.b16 %v1041, %v1039
  %v1052 = vpack.c.b16 %v1044, %v1042
  %v1053 = vpack.c.b16 %v1045, %v1043
  %v1063 = vsel %vm184, %v1021, 0
  %1065 = vmatprep.subr.bf16.mxu0 %v1047
  %1066 = vmatpush1.bf16.msra.mxu0 %v1046
  %1067 = vmatprep.subr.bf16.mxu0 %v1049
  %1068 = vmatpush1.bf16.msra.mxu0 %v1048
  %1069 = vmatprep.subr.bf16.mxu0 %v1051
  %1070 = vmatpush1.bf16.msra.mxu0 %v1050
  %1071 = vmatprep.subr.bf16.mxu0 %v1053
  %1072 = vmatpush1.bf16.msra.mxu0 %v1052
  %1073 = vmatprep.subr.bf16.mxu0 0
  %1074 = vmatpush1.bf16.msra.mxu0 0
  %1075 = vmatprep.subr.bf16.mxu0 0
  %1076 = vmatpush1.bf16.msra.mxu0 0
  %1077 = vmatprep.subr.bf16.mxu0 0
  %1078 = vmatpush1.bf16.msra.mxu0 0
  %1079 = vmatprep.subr.bf16.mxu0 0
  %1080 = vmatpush1.bf16.msra.mxu0 0
  %1081 = vmatprep.subr.bf16.mxu0 0
  %1082 = vmatpush1.bf16.msra.mxu0 0
  %1083 = vmatprep.subr.bf16.mxu0 0
  %1084 = vmatpush1.bf16.msra.mxu0 0
  %1085 = vmatprep.subr.bf16.mxu0 0
  %1086 = vmatpush1.bf16.msra.mxu0 0
  %1087 = vmatprep.subr.bf16.mxu0 0
  %1088 = vmatpush1.bf16.msra.mxu0 0
  %1089 = vmatprep.subr.bf16.mxu0 0
  %1090 = vmatpush1.bf16.msra.mxu0 0
  %1091 = vmatprep.subr.bf16.mxu0 0
  %1092 = vmatpush1.bf16.msra.mxu0 0
  %1093 = vmatprep.subr.bf16.mxu0 0
  %1094 = vmatpush1.bf16.msra.mxu0 0
  %1095 = vmatprep.subr.bf16.mxu0 0
  %1096 = vmatpush1.bf16.msra.mxu0 0
  %1097 = vmatprep.mubr.bf16.mxu0 0
  %1098 = vmatmul.mubr.bf16.gmra.mrb[0].mxu0 %v1063
  %v1099 = vpop.f32.mrb[0].mxu0
  %v1100 = vadd.f32 0.0, %v1099
  %v1101 = vpop.f32.mrb[0].mxu0
  %v1102 = vadd.f32 0.0, %v1101
  %v1103 = vpop.f32.mrb[0].mxu0
  %v1104 = vpop.f32.mrb[0].mxu0
  %1105 = vdwg.mxu0
  %v1106 = vadd.f32 %v996, %v1100
  %v1107 = vsub.f32 0.0, %v1106
  %v1108 = vmul.f32 %v1107, 1.442695
  %v1109 = vpow.pop %v1108
  %v1110 = vadd.f32 %v1109, 1.0
  %v1111 = vrcp.pop %v1110
  %v1112 = vmul.f32 1.0, %v1111
  %v1113 = vadd.f32 %v1102, %v1009
  %v1114 = vmul.f32 %v1112, %v1113
  %v1115 = vadd.f32 %v998, %v1114
  %v1116 = vtanh.pop %v1115
  %v1118 = vrot.slane %v1116, 2
  %v1120 = vsub.f32 %v843, %v1118
  %v1122 = vrot.slane %v1120, 6
  %1123 = vrot.lane.b32.xlu0 %v1122, 64
  %v1124 = vpop.permute.xlu0 %1123
  %v1126 = vmul.f32 %v1112, %v1124
  %1128 = vrot.lane.b32.xlu0 %v1126, 64
  %v1129 = vpop.permute.xlu0 %1128
  %v1131 = vadd.f32 %v1116, %v1129
  %vm1132 = vcmask 254976
  %1133 = vst.msk [vmem:[#allocation3] sm:$0x3] %vm1132, %v1131
  %vm1134 = vcmask 517376
  %1135 = vst.msk [vmem:[#allocation3 + $0xe] sm:$0x3] %vm1134, %v1131
  %v1136 = vpack.c.bf16 %v1131, %v1131
  %v1138 = vsel %vm184, %v1136, 0
  %1140 = vmatprep.subr.bf16.mxu0 %v1047
  %1141 = vmatpush1.bf16.msra.mxu0 %v1046
  %1142 = vmatprep.subr.bf16.mxu0 %v1049
  %1143 = vmatpush1.bf16.msra.mxu0 %v1048
  %1144 = vmatprep.subr.bf16.mxu0 %v1051
  %1145 = vmatpush1.bf16.msra.mxu0 %v1050
  %1146 = vmatprep.subr.bf16.mxu0 %v1053
  %1147 = vmatpush1.bf16.msra.mxu0 %v1052
  %1148 = vmatprep.subr.bf16.mxu0 0
  %1149 = vmatpush1.bf16.msra.mxu0 0
  %1150 = vmatprep.subr.bf16.mxu0 0
  %1151 = vmatpush1.bf16.msra.mxu0 0
  %1152 = vmatprep.subr.bf16.mxu0 0
  %1153 = vmatpush1.bf16.msra.mxu0 0
  %1154 = vmatprep.subr.bf16.mxu0 0
  %1155 = vmatpush1.bf16.msra.mxu0 0
  %1156 = vmatprep.subr.bf16.mxu0 0
  %1157 = vmatpush1.bf16.msra.mxu0 0
  %1158 = vmatprep.subr.bf16.mxu0 0
  %1159 = vmatpush1.bf16.msra.mxu0 0
  %1160 = vmatprep.subr.bf16.mxu0 0
  %1161 = vmatpush1.bf16.msra.mxu0 0
  %1162 = vmatprep.subr.bf16.mxu0 0
  %1163 = vmatpush1.bf16.msra.mxu0 0
  %1164 = vmatprep.subr.bf16.mxu0 0
  %1165 = vmatpush1.bf16.msra.mxu0 0
  %1166 = vmatprep.subr.bf16.mxu0 0
  %1167 = vmatpush1.bf16.msra.mxu0 0
  %1168 = vmatprep.subr.bf16.mxu0 0
  %1169 = vmatpush1.bf16.msra.mxu0 0
  %1170 = vmatprep.subr.bf16.mxu0 0
  %1171 = vmatpush1.bf16.msra.mxu0 0
  %1172 = vmatprep.mubr.bf16.mxu0 0
  %1173 = vmatmul.mubr.bf16.gmra.mrb[0].mxu0 %v1138
  %v1174 = vpop.f32.mrb[0].mxu0
  %v1175 = vadd.f32 0.0, %v1174
  %v1176 = vpop.f32.mrb[0].mxu0
  %v1177 = vadd.f32 0.0, %v1176
  %v1178 = vpop.f32.mrb[0].mxu0
  %v1179 = vpop.f32.mrb[0].mxu0
  %1180 = vdwg.mxu0
  %v1182 = vrot.slane %v1175, 6
  %v1184 = vadd.f32 %v996, %v1182
  %v1185 = vsub.f32 0.0, %v1184
  %v1186 = vmul.f32 %v1185, 1.442695
  %v1187 = vpow.pop %v1186
  %v1188 = vadd.f32 %v1187, 1.0
  %v1189 = vrcp.pop %v1188
  %v1190 = vmul.f32 1.0, %v1189
  %v1191 = vadd.f32 %v1177, %v1009
  %v1193 = vrot.slane %v1191, 6
  %v1195 = vmul.f32 %v1190, %v1193
  %v1196 = vadd.f32 %v998, %v1195
  %v1197 = vtanh.pop %v1196
  %v1199 = vrot.slane %v1197, 2
  %v1201 = vsub.f32 %v1131, %v1199
  %v1203 = vrot.slane %v1201, 6
  %1204 = vrot.lane.b32.xlu0 %v1203, 64
  %v1205 = vpop.permute.xlu0 %1204
  %v1207 = vmul.f32 %v1190, %v1205
  %1209 = vrot.lane.b32.xlu0 %v1207, 64
  %v1210 = vpop.permute.xlu0 %1209
  %v1212 = vadd.f32 %v1197, %v1210
  %vm1213 = vcmask 257026
  %1214 = vst.msk [vmem:[#allocation3] sm:$0xc] %vm1213, %v1212
  %vm1215 = vcmask 519426
  %1216 = vst.msk [vmem:[#allocation3 + $0xa] sm:$0xc] %vm1215, %v1212
  %v1217 = vpack.c.bf16 %v1212, %v1212
  %v1219 = vrot.slane %v1217, 1
  %v1221 = vsel %vm184, %v1219, 0
  %1223 = vmatprep.subr.bf16.mxu0 %v1047
  %1224 = vmatpush1.bf16.msra.mxu0 %v1046
  %1225 = vmatprep.subr.bf16.mxu0 %v1049
  %1226 = vmatpush1.bf16.msra.mxu0 %v1048
  %1227 = vmatprep.subr.bf16.mxu0 %v1051
  %1228 = vmatpush1.bf16.msra.mxu0 %v1050
  %1229 = vmatprep.subr.bf16.mxu0 %v1053
  %1230 = vmatpush1.bf16.msra.mxu0 %v1052
  %1231 = vmatprep.subr.bf16.mxu0 0
  %1232 = vmatpush1.bf16.msra.mxu0 0
  %1233 = vmatprep.subr.bf16.mxu0 0
  %1234 = vmatpush1.bf16.msra.mxu0 0
  %1235 = vmatprep.subr.bf16.mxu0 0
  %1236 = vmatpush1.bf16.msra.mxu0 0
  %1237 = vmatprep.subr.bf16.mxu0 0
  %1238 = vmatpush1.bf16.msra.mxu0 0
  %1239 = vmatprep.subr.bf16.mxu0 0
  %1240 = vmatpush1.bf16.msra.mxu0 0
  %1241 = vmatprep.subr.bf16.mxu0 0
  %1242 = vmatpush1.bf16.msra.mxu0 0
  %1243 = vmatprep.subr.bf16.mxu0 0
  %1244 = vmatpush1.bf16.msra.mxu0 0
  %1245 = vmatprep.subr.bf16.mxu0 0
  %1246 = vmatpush1.bf16.msra.mxu0 0
  %1247 = vmatprep.subr.bf16.mxu0 0
  %1248 = vmatpush1.bf16.msra.mxu0 0
  %1249 = vmatprep.subr.bf16.mxu0 0
  %1250 = vmatpush1.bf16.msra.mxu0 0
  %1251 = vmatprep.subr.bf16.mxu0 0
  %1252 = vmatpush1.bf16.msra.mxu0 0
  %1253 = vmatprep.subr.bf16.mxu0 0
  %1254 = vmatpush1.bf16.msra.mxu0 0
  %1255 = vmatprep.mubr.bf16.mxu0 0
  %1256 = vmatmul.mubr.bf16.gmra.mrb[0].mxu0 %v1221
  %v1257 = vpop.f32.mrb[0].mxu0
  %v1258 = vadd.f32 0.0, %v1257
  %v1259 = vpop.f32.mrb[0].mxu0
  %v1260 = vadd.f32 0.0, %v1259
  %v1261 = vpop.f32.mrb[0].mxu0
  %v1262 = vpop.f32.mrb[0].mxu0
  %1263 = vdwg.mxu0
  %v1265 = vrot.slane %v1258, 4
  %v1267 = vadd.f32 %v996, %v1265
  %v1268 = vsub.f32 0.0, %v1267
  %v1269 = vmul.f32 %v1268, 1.442695
  %v1270 = vpow.pop %v1269
  %v1271 = vadd.f32 %v1270, 1.0
  %v1272 = vrcp.pop %v1271
  %v1273 = vmul.f32 1.0, %v1272
  %v1274 = vadd.f32 %v1260, %v1009
  %v1276 = vrot.slane %v1274, 4
  %v1278 = vmul.f32 %v1273, %v1276
  %v1279 = vadd.f32 %v998, %v1278
  %v1280 = vtanh.pop %v1279
  %v1282 = vrot.slane %v1280, 2
  %v1284 = vsub.f32 %v1212, %v1282
  %v1286 = vrot.slane %v1284, 6
  %1287 = vrot.lane.b32.xlu0 %v1286, 64
  %v1288 = vpop.permute.xlu0 %1287
  %v1290 = vmul.f32 %v1273, %v1288
  %1292 = vrot.lane.b32.xlu0 %v1290, 64
  %v1293 = vpop.permute.xlu0 %1292
  %v1295 = vadd.f32 %v1280, %v1293
  %vm1296 = vcmask 259076
  %1297 = vst.msk [vmem:[#allocation3] sm:$0x30] %vm1296, %v1295
  %vm1298 = vcmask 521476
  %1299 = vst.msk [vmem:[#allocation3 + $0x6] sm:$0x30] %vm1298, %v1295
  %v1300 = vpack.c.bf16 %v1295, %v1295
  %v1302 = vrot.slane %v1300, 2
  %v1304 = vsel %vm184, %v1302, 0
  %1306 = vmatprep.subr.bf16.mxu0 %v1047
  %1307 = vmatpush1.bf16.msra.mxu0 %v1046
  %1308 = vmatprep.subr.bf16.mxu0 %v1049
  %1309 = vmatpush1.bf16.msra.mxu0 %v1048
  %1310 = vmatprep.subr.bf16.mxu0 %v1051
  %1311 = vmatpush1.bf16.msra.mxu0 %v1050
  %1312 = vmatprep.subr.bf16.mxu0 %v1053
  %1313 = vmatpush1.bf16.msra.mxu0 %v1052
  %1314 = vmatprep.subr.bf16.mxu0 0
  %1315 = vmatpush1.bf16.msra.mxu0 0
  %1316 = vmatprep.subr.bf16.mxu0 0
  %1317 = vmatpush1.bf16.msra.mxu0 0
  %1318 = vmatprep.subr.bf16.mxu0 0
  %1319 = vmatpush1.bf16.msra.mxu0 0
  %1320 = vmatprep.subr.bf16.mxu0 0
  %1321 = vmatpush1.bf16.msra.mxu0 0
  %1322 = vmatprep.subr.bf16.mxu0 0
  %1323 = vmatpush1.bf16.msra.mxu0 0
  %1324 = vmatprep.subr.bf16.mxu0 0
  %1325 = vmatpush1.bf16.msra.mxu0 0
  %1326 = vmatprep.subr.bf16.mxu0 0
  %1327 = vmatpush1.bf16.msra.mxu0 0
  %1328 = vmatprep.subr.bf16.mxu0 0
  %1329 = vmatpush1.bf16.msra.mxu0 0
  %1330 = vmatprep.subr.bf16.mxu0 0
  %1331 = vmatpush1.bf16.msra.mxu0 0
  %1332 = vmatprep.subr.bf16.mxu0 0
  %1333 = vmatpush1.bf16.msra.mxu0 0
  %1334 = vmatprep.subr.bf16.mxu0 0
  %1335 = vmatpush1.bf16.msra.mxu0 0
  %1336 = vmatprep.subr.bf16.mxu0 0
  %1337 = vmatpush1.bf16.msra.mxu0 0
  %1338 = vmatprep.mubr.bf16.mxu0 0
  %1339 = vmatmul.mubr.bf16.gmra.mrb[0].mxu0 %v1304
  %v1340 = vpop.f32.mrb[0].mxu0
  %v1341 = vadd.f32 0.0, %v1340
  %v1342 = vpop.f32.mrb[0].mxu0
  %v1343 = vadd.f32 0.0, %v1342
  %v1344 = vpop.f32.mrb[0].mxu0
  %v1345 = vpop.f32.mrb[0].mxu0
  %1346 = vdwg.mxu0
  %v1348 = vrot.slane %v1341, 2
  %v1350 = vadd.f32 %v996, %v1348
  %v1351 = vsub.f32 0.0, %v1350
  %v1352 = vmul.f32 %v1351, 1.442695
  %v1353 = vpow.pop %v1352
  %v1354 = vadd.f32 %v1353, 1.0
  %v1355 = vrcp.pop %v1354
  %v1356 = vmul.f32 1.0, %v1355
  %v1357 = vadd.f32 %v1343, %v1009
  %v1359 = vrot.slane %v1357, 2
  %v1361 = vmul.f32 %v1356, %v1359
  %v1362 = vadd.f32 %v998, %v1361
  %v1363 = vtanh.pop %v1362
  %v1365 = vrot.slane %v1363, 2
  %v1367 = vsub.f32 %v1295, %v1365
  %v1369 = vrot.slane %v1367, 6
  %1370 = vrot.lane.b32.xlu0 %v1369, 64
  %v1371 = vpop.permute.xlu0 %1370
  %v1373 = vmul.f32 %v1356, %v1371
  %1375 = vrot.lane.b32.xlu0 %v1373, 64
  %v1376 = vpop.permute.xlu0 %1375
  %v1378 = vadd.f32 %v1363, %v1376
  %vm1379 = vcmask 261126
  %1380 = vst.msk [vmem:[#allocation3] sm:$0xc0] %vm1379, %v1378
  %vm1381 = vcmask 523526
  %1382 = vst.msk [vmem:[#allocation3 + $0x2] sm:$0xc0] %vm1381, %v1378
  %v1383 = vpack.c.bf16 %v1378, %v1378
  %v1385 = vrot.slane %v1383, 3
  %v1387 = vsel %vm184, %v1385, 0
  %1389 = vmatprep.subr.bf16.mxu0 %v1047
  %1390 = vmatpush1.bf16.msra.mxu0 %v1046
  %1391 = vmatprep.subr.bf16.mxu0 %v1049
  %1392 = vmatpush1.bf16.msra.mxu0 %v1048
  %1393 = vmatprep.subr.bf16.mxu0 %v1051
  %1394 = vmatpush1.bf16.msra.mxu0 %v1050
  %1395 = vmatprep.subr.bf16.mxu0 %v1053
  %1396 = vmatpush1.bf16.msra.mxu0 %v1052
  %1397 = vmatprep.subr.bf16.mxu0 0
  %1398 = vmatpush1.bf16.msra.mxu0 0
  %1399 = vmatprep.subr.bf16.mxu0 0
  %1400 = vmatpush1.bf16.msra.mxu0 0
  %1401 = vmatprep.subr.bf16.mxu0 0
  %1402 = vmatpush1.bf16.msra.mxu0 0
  %1403 = vmatprep.subr.bf16.mxu0 0
  %1404 = vmatpush1.bf16.msra.mxu0 0
  %1405 = vmatprep.subr.bf16.mxu0 0
  %1406 = vmatpush1.bf16.msra.mxu0 0
  %1407 = vmatprep.subr.bf16.mxu0 0
  %1408 = vmatpush1.bf16.msra.mxu0 0
  %1409 = vmatprep.subr.bf16.mxu0 0
  %1410 = vmatpush1.bf16.msra.mxu0 0
  %1411 = vmatprep.subr.bf16.mxu0 0
  %1412 = vmatpush1.bf16.msra.mxu0 0
  %1413 = vmatprep.subr.bf16.mxu0 0
  %1414 = vmatpush1.bf16.msra.mxu0 0
  %1415 = vmatprep.subr.bf16.mxu0 0
  %1416 = vmatpush1.bf16.msra.mxu0 0
  %1417 = vmatprep.subr.bf16.mxu0 0
  %1418 = vmatpush1.bf16.msra.mxu0 0
  %1419 = vmatprep.subr.bf16.mxu0 0
  %1420 = vmatpush1.bf16.msra.mxu0 0
  %1421 = vmatprep.mubr.bf16.mxu0 0
  %1422 = vmatmul.mubr.bf16.gmra.mrb[0].mxu0 %v1387
  %v1423 = vpop.f32.mrb[0].mxu0
  %v1424 = vadd.f32 0.0, %v1423
  %v1425 = vpop.f32.mrb[0].mxu0
  %v1426 = vadd.f32 0.0, %v1425
  %v1427 = vpop.f32.mrb[0].mxu0
  %v1428 = vpop.f32.mrb[0].mxu0
  %1429 = vdwg.mxu0
  %v1430 = vadd.f32 %v1000, %v1424
  %v1431 = vsub.f32 0.0, %v1430
  %v1432 = vmul.f32 %v1431, 1.442695
  %v1433 = vpow.pop %v1432
  %v1434 = vadd.f32 %v1433, 1.0
  %v1435 = vrcp.pop %v1434
  %v1436 = vmul.f32 1.0, %v1435
  %v1437 = vadd.f32 %v1426, %v1009
  %v1438 = vmul.f32 %v1436, %v1437
  %v1439 = vadd.f32 %v1002, %v1438
  %v1440 = vtanh.pop %v1439
  %v1442 = vrot.slane %v1440, 2
  %v1444 = vsub.f32 %v1378, %v1442
  %v1446 = vrot.slane %v1444, 6
  %1447 = vrot.lane.b32.xlu0 %v1446, 64
  %v1448 = vpop.permute.xlu0 %1447
  %v1450 = vmul.f32 %v1436, %v1448
  %1452 = vrot.lane.b32.xlu0 %v1450, 64
  %v1453 = vpop.permute.xlu0 %1452
  %v1455 = vadd.f32 %v1440, %v1453
  %1456 = vst.msk [vmem:[#allocation3 + $0x8] sm:$0x3] %vm1132, %v1455
  %1457 = vst.msk [vmem:[#allocation3 + $0x6] sm:$0x3] %vm1134, %v1455
  %v1458 = vpack.c.bf16 %v1455, %v1455
  %v1460 = vsel %vm184, %v1458, 0
  %1462 = vmatprep.subr.bf16.mxu0 %v1047
  %1463 = vmatpush1.bf16.msra.mxu0 %v1046
  %1464 = vmatprep.subr.bf16.mxu0 %v1049
  %1465 = vmatpush1.bf16.msra.mxu0 %v1048
  %1466 = vmatprep.subr.bf16.mxu0 %v1051
  %1467 = vmatpush1.bf16.msra.mxu0 %v1050
  %1468 = vmatprep.subr.bf16.mxu0 %v1053
  %1469 = vmatpush1.bf16.msra.mxu0 %v1052
  %1470 = vmatprep.subr.bf16.mxu0 0
  %1471 = vmatpush1.bf16.msra.mxu0 0
  %1472 = vmatprep.subr.bf16.mxu0 0
  %1473 = vmatpush1.bf16.msra.mxu0 0
  %1474 = vmatprep.subr.bf16.mxu0 0
  %1475 = vmatpush1.bf16.msra.mxu0 0
  %1476 = vmatprep.subr.bf16.mxu0 0
  %1477 = vmatpush1.bf16.msra.mxu0 0
  %1478 = vmatprep.subr.bf16.mxu0 0
  %1479 = vmatpush1.bf16.msra.mxu0 0
  %1480 = vmatprep.subr.bf16.mxu0 0
  %1481 = vmatpush1.bf16.msra.mxu0 0
  %1482 = vmatprep.subr.bf16.mxu0 0
  %1483 = vmatpush1.bf16.msra.mxu0 0
  %1484 = vmatprep.subr.bf16.mxu0 0
  %1485 = vmatpush1.bf16.msra.mxu0 0
  %1486 = vmatprep.subr.bf16.mxu0 0
  %1487 = vmatpush1.bf16.msra.mxu0 0
  %1488 = vmatprep.subr.bf16.mxu0 0
  %1489 = vmatpush1.bf16.msra.mxu0 0
  %1490 = vmatprep.subr.bf16.mxu0 0
  %1491 = vmatpush1.bf16.msra.mxu0 0
  %1492 = vmatprep.subr.bf16.mxu0 0
  %1493 = vmatpush1.bf16.msra.mxu0 0
  %1494 = vmatprep.mubr.bf16.mxu0 0
  %1495 = vmatmul.mubr.bf16.gmra.mrb[0].mxu0 %v1460
  %v1496 = vpop.f32.mrb[0].mxu0
  %v1497 = vadd.f32 0.0, %v1496
  %v1498 = vpop.f32.mrb[0].mxu0
  %v1499 = vadd.f32 0.0, %v1498
  %v1500 = vpop.f32.mrb[0].mxu0
  %v1501 = vpop.f32.mrb[0].mxu0
  %1502 = vdwg.mxu0
  %v1504 = vrot.slane %v1497, 6
  %v1506 = vadd.f32 %v1000, %v1504
  %v1507 = vsub.f32 0.0, %v1506
  %v1508 = vmul.f32 %v1507, 1.442695
  %v1509 = vpow.pop %v1508
  %v1510 = vadd.f32 %v1509, 1.0
  %v1511 = vrcp.pop %v1510
  %v1512 = vmul.f32 1.0, %v1511
  %v1513 = vadd.f32 %v1499, %v1009
  %v1515 = vrot.slane %v1513, 6
  %v1517 = vmul.f32 %v1512, %v1515
  %v1518 = vadd.f32 %v1002, %v1517
  %v1519 = vtanh.pop %v1518
  %v1521 = vrot.slane %v1519, 2
  %v1523 = vsub.f32 %v1455, %v1521
  %v1525 = vrot.slane %v1523, 6
  %1526 = vrot.lane.b32.xlu0 %v1525, 64
  %v1527 = vpop.permute.xlu0 %1526
  %v1529 = vmul.f32 %v1512, %v1527
  %1531 = vrot.lane.b32.xlu0 %v1529, 64
  %v1532 = vpop.permute.xlu0 %1531
  %v1534 = vadd.f32 %v1519, %v1532
  %1535 = vst.msk [vmem:[#allocation3 + $0x8] sm:$0xc] %vm1213, %v1534
  %1536 = vst.msk [vmem:[#allocation3 + $0x2] sm:$0xc] %vm1215, %v1534
  %v1537 = vpack.c.bf16 %v1534, %v1534
  %v1539 = vrot.slane %v1537, 1
  %v1541 = vsel %vm184, %v1539, 0
  %1543 = vmatprep.subr.bf16.mxu0 %v1047
  %1544 = vmatpush1.bf16.msra.mxu0 %v1046
  %1545 = vmatprep.subr.bf16.mxu0 %v1049
  %1546 = vmatpush1.bf16.msra.mxu0 %v1048
  %1547 = vmatprep.subr.bf16.mxu0 %v1051
  %1548 = vmatpush1.bf16.msra.mxu0 %v1050
  %1549 = vmatprep.subr.bf16.mxu0 %v1053
  %1550 = vmatpush1.bf16.msra.mxu0 %v1052
  %1551 = vmatprep.subr.bf16.mxu0 0
  %1552 = vmatpush1.bf16.msra.mxu0 0
  %1553 = vmatprep.subr.bf16.mxu0 0
  %1554 = vmatpush1.bf16.msra.mxu0 0
  %1555 = vmatprep.subr.bf16.mxu0 0
  %1556 = vmatpush1.bf16.msra.mxu0 0
  %1557 = vmatprep.subr.bf16.mxu0 0
  %1558 = vmatpush1.bf16.msra.mxu0 0
  %1559 = vmatprep.subr.bf16.mxu0 0
  %1560 = vmatpush1.bf16.msra.mxu0 0
  %1561 = vmatprep.subr.bf16.mxu0 0
  %1562 = vmatpush1.bf16.msra.mxu0 0
  %1563 = vmatprep.subr.bf16.mxu0 0
  %1564 = vmatpush1.bf16.msra.mxu0 0
  %1565 = vmatprep.subr.bf16.mxu0 0
  %1566 = vmatpush1.bf16.msra.mxu0 0
  %1567 = vmatprep.subr.bf16.mxu0 0
  %1568 = vmatpush1.bf16.msra.mxu0 0
  %1569 = vmatprep.subr.bf16.mxu0 0
  %1570 = vmatpush1.bf16.msra.mxu0 0
  %1571 = vmatprep.subr.bf16.mxu0 0
  %1572 = vmatpush1.bf16.msra.mxu0 0
  %1573 = vmatprep.subr.bf16.mxu0 0
  %1574 = vmatpush1.bf16.msra.mxu0 0
  %1575 = vmatprep.mubr.bf16.mxu0 0
  %1576 = vmatmul.mubr.bf16.gmra.mrb[0].mxu0 %v1541
  %v1577 = vpop.f32.mrb[0].mxu0
  %v1578 = vadd.f32 0.0, %v1577
  %v1579 = vpop.f32.mrb[0].mxu0
  %v1580 = vadd.f32 0.0, %v1579
  %v1581 = vpop.f32.mrb[0].mxu0
  %v1582 = vpop.f32.mrb[0].mxu0
  %1583 = vdwg.mxu0
  %v1585 = vrot.slane %v1578, 4
  %v1587 = vadd.f32 %v1000, %v1585
  %v1588 = vsub.f32 0.0, %v1587
  %v1589 = vmul.f32 %v1588, 1.442695
  %v1590 = vpow.pop %v1589
  %v1591 = vadd.f32 %v1590, 1.0
  %v1592 = vrcp.pop %v1591
  %v1593 = vmul.f32 1.0, %v1592
  %v1594 = vadd.f32 %v1580, %v1009
  %v1596 = vrot.slane %v1594, 4
  %v1598 = vmul.f32 %v1593, %v1596
  %v1599 = vadd.f32 %v1002, %v1598
  %v1600 = vtanh.pop %v1599
  %v1602 = vrot.slane %v1600, 2
  %v1604 = vsub.f32 %v1534, %v1602
  %v1606 = vrot.slane %v1604, 6
  %1607 = vrot.lane.b32.xlu0 %v1606, 64
  %v1608 = vpop.permute.xlu0 %1607
  %v1610 = vmul.f32 %v1593, %v1608
  %1612 = vrot.lane.b32.xlu0 %v1610, 64
  %v1613 = vpop.permute.xlu0 %1612
  %v1615 = vadd.f32 %v1600, %v1613
  %1616 = vst.msk [vmem:[#allocation3 + $0x8] sm:$0x30] %vm1296, %v1615
  %1617 = vst.msk [vmem:[#allocation3 - $0x2] sm:$0x30] %vm1298, %v1615
  %v1618 = vpack.c.bf16 %v1615, %v1615
  %v1620 = vrot.slane %v1618, 2
  %v1622 = vsel %vm184, %v1620, 0
  %1624 = vmatprep.subr.bf16.mxu0 %v1047
  %1625 = vmatpush1.bf16.msra.mxu0 %v1046
  %1626 = vmatprep.subr.bf16.mxu0 %v1049
  %1627 = vmatpush1.bf16.msra.mxu0 %v1048
  %1628 = vmatprep.subr.bf16.mxu0 %v1051
  %1629 = vmatpush1.bf16.msra.mxu0 %v1050
  %1630 = vmatprep.subr.bf16.mxu0 %v1053
  %1631 = vmatpush1.bf16.msra.mxu0 %v1052
  %1632 = vmatprep.subr.bf16.mxu0 0
  %1633 = vmatpush1.bf16.msra.mxu0 0
  %1634 = vmatprep.subr.bf16.mxu0 0
  %1635 = vmatpush1.bf16.msra.mxu0 0
  %1636 = vmatprep.subr.bf16.mxu0 0
  %1637 = vmatpush1.bf16.msra.mxu0 0
  %1638 = vmatprep.subr.bf16.mxu0 0
  %1639 = vmatpush1.bf16.msra.mxu0 0
  %1640 = vmatprep.subr.bf16.mxu0 0
  %1641 = vmatpush1.bf16.msra.mxu0 0
  %1642 = vmatprep.subr.bf16.mxu0 0
  %1643 = vmatpush1.bf16.msra.mxu0 0
  %1644 = vmatprep.subr.bf16.mxu0 0
  %1645 = vmatpush1.bf16.msra.mxu0 0
  %1646 = vmatprep.subr.bf16.mxu0 0
  %1647 = vmatpush1.bf16.msra.mxu0 0
  %1648 = vmatprep.subr.bf16.mxu0 0
  %1649 = vmatpush1.bf16.msra.mxu0 0
  %1650 = vmatprep.subr.bf16.mxu0 0
  %1651 = vmatpush1.bf16.msra.mxu0 0
  %1652 = vmatprep.subr.bf16.mxu0 0
  %1653 = vmatpush1.bf16.msra.mxu0 0
  %1654 = vmatprep.subr.bf16.mxu0 0
  %1655 = vmatpush1.bf16.msra.mxu0 0
  %1656 = vmatprep.mubr.bf16.mxu0 0
  %1657 = vmatmul.mubr.bf16.gmra.mrb[0].mxu0 %v1622
  %v1658 = vpop.f32.mrb[0].mxu0
  %v1659 = vadd.f32 0.0, %v1658
  %v1660 = vpop.f32.mrb[0].mxu0
  %v1661 = vadd.f32 0.0, %v1660
  %v1662 = vpop.f32.mrb[0].mxu0
  %v1663 = vpop.f32.mrb[0].mxu0
  %1664 = vdwg.mxu0
  %v1666 = vrot.slane %v1659, 2
  %v1668 = vadd.f32 %v1000, %v1666
  %v1669 = vsub.f32 0.0, %v1668
  %v1670 = vmul.f32 %v1669, 1.442695
  %v1671 = vpow.pop %v1670
  %v1672 = vadd.f32 %v1671, 1.0
  %v1673 = vrcp.pop %v1672
  %v1674 = vmul.f32 1.0, %v1673
  %v1675 = vadd.f32 %v1661, %v1009
  %v1677 = vrot.slane %v1675, 2
  %v1679 = vmul.f32 %v1674, %v1677
  %v1680 = vadd.f32 %v1002, %v1679
  %v1681 = vtanh.pop %v1680
  %v1683 = vrot.slane %v1681, 2
  %v1685 = vsub.f32 %v1615, %v1683
  %v1687 = vrot.slane %v1685, 6
  %1688 = vrot.lane.b32.xlu0 %v1687, 64
  %v1689 = vpop.permute.xlu0 %1688
  %v1691 = vmul.f32 %v1674, %v1689
  %1693 = vrot.lane.b32.xlu0 %v1691, 64
  %v1694 = vpop.permute.xlu0 %1693
  %v1696 = vadd.f32 %v1681, %v1694
  %1697 = vst.msk [vmem:[#allocation3 + $0x8] sm:$0xc0] %vm1379, %v1696
  %1698 = vst.msk [vmem:[#allocation3 - $0x6] sm:$0xc0] %vm1381, %v1696
  %v1699 = vld [vmem:[#allocation3] sm:$0xff]
  %v1700 = vld [vmem:[#allocation3 + $0x8] sm:$0xff]
  %v1701 = vpack.c.bf16 %v1700, %v1699
  %v1702 = vld [vmem:[%s9] sm:$0xf]
  %v1703 = vld [vmem:[%s9 + $0x4] sm:$0xf]
  %v1704 = vld [vmem:[%s9 + $0x8] sm:$0xf]
  %v1705 = vld [vmem:[%s9 + $0xc] sm:$0xf]
  %v1706 = vld [vmem:[%s9 + $0x10] sm:$0xf]
  %v1707 = vld [vmem:[%s9 + $0x14] sm:$0xf]
  %v1708 = vld [vmem:[%s9 + $0x18] sm:$0xf]
  %v1709 = vld [vmem:[%s9 + $0x1c] sm:$0xf]
  %v1710 = vld [vmem:[%s10] sm:$0x1]
  %v1712 = vlaneseq
  %v1713 = vshrl.u32 %v1712, 7
  %v1714 = vsub.s32 0, %v1713
  %v1715 = vrot.slane %v1710, %v1714
  %v1725 = vunpack.c.l.b16 %v1702
  %v1726 = vunpack.c.l.b16 %v1703
  %v1727 = vunpack.c.l.b16 %v1704
  %v1728 = vunpack.c.l.b16 %v1705
  %v1729 = vunpack.c.l.b16 %v1706
  %v1730 = vunpack.c.l.b16 %v1707
  %v1731 = vunpack.c.l.b16 %v1708
  %v1732 = vunpack.c.l.b16 %v1709
  %v1733 = vpack.c.b16 %v1726, %v1725
  %v1734 = vpack.c.b16 %v1728, %v1727
  %v1735 = vpack.c.b16 %v1730, %v1729
  %v1736 = vpack.c.b16 %v1732, %v1731
  %v1742 = vsel %vm184, %v1701, 0
  %1744 = vmatprep.subr.bf16.mxu0 0
  %1745 = vmatpush1.bf16.msra.mxu0 %v1733
  %1746 = vmatprep.subr.bf16.mxu0 0
  %1747 = vmatpush1.bf16.msra.mxu0 %v1734
  %1748 = vmatprep.subr.bf16.mxu0 0
  %1749 = vmatpush1.bf16.msra.mxu0 %v1735
  %1750 = vmatprep.subr.bf16.mxu0 0
  %1751 = vmatpush1.bf16.msra.mxu0 %v1736
  %1752 = vmatprep.subr.bf16.mxu0 0
  %1753 = vmatpush1.bf16.msra.mxu0 0
  %1754 = vmatprep.subr.bf16.mxu0 0
  %1755 = vmatpush1.bf16.msra.mxu0 0
  %1756 = vmatprep.subr.bf16.mxu0 0
  %1757 = vmatpush1.bf16.msra.mxu0 0
  %1758 = vmatprep.subr.bf16.mxu0 0
  %1759 = vmatpush1.bf16.msra.mxu0 0
  %1760 = vmatprep.subr.bf16.mxu0 0
  %1761 = vmatpush1.bf16.msra.mxu0 0
  %1762 = vmatprep.subr.bf16.mxu0 0
  %1763 = vmatpush1.bf16.msra.mxu0 0
  %1764 = vmatprep.subr.bf16.mxu0 0
  %1765 = vmatpush1.bf16.msra.mxu0 0
  %1766 = vmatprep.subr.bf16.mxu0 0
  %1767 = vmatpush1.bf16.msra.mxu0 0
  %1768 = vmatprep.subr.bf16.mxu0 0
  %1769 = vmatpush1.bf16.msra.mxu0 0
  %1770 = vmatprep.subr.bf16.mxu0 0
  %1771 = vmatpush1.bf16.msra.mxu0 0
  %1772 = vmatprep.subr.bf16.mxu0 0
  %1773 = vmatpush1.bf16.msra.mxu0 0
  %1774 = vmatprep.subr.bf16.mxu0 0
  %1775 = vmatpush1.bf16.msra.mxu0 0
  %1776 = vmatprep.mubr.bf16.mxu0 0
  %1777 = vmatmul.mubr.bf16.gmra.mrb[0].mxu0 %v1742
  %v1778 = vpop.f32.mrb[0].mxu0
  %v1779 = vadd.f32 %v1715, %v1778
  %v1780 = vpop.f32.mrb[0].mxu0
  %v1781 = vpop.f32.mrb[0].mxu0
  %v1782 = vadd.f32 %v1715, %v1781
  %v1783 = vpop.f32.mrb[0].mxu0
  %1784 = vdwg.mxu0
  %1785 = vst [vmem:[%s11] sm:$0xff] %v1779
  %1786 = vst [vmem:[%s11 + $0x8] sm:$0xff] %v1782
  // Predicated region
  $region46: #{bigru_crf_forward.1} parent=0 // pred_check
    _
  $region47: #{bigru_crf_forward.1} parent=0 // pred_check_branch
    %1788 = sbr.rel (0) target = $region49
  $region48: #{bigru_crf_forward.1} parent=0 // pred_region
    _
  $region49: #{bigru_crf_forward.1} parent=0 // pred_fallthru
    _
  // Predicated region
  $region50: #{bigru_crf_forward.1} parent=0 // pred_check
    _
  $region51: #{bigru_crf_forward.1} parent=0 // pred_check_branch
    %1790 = sbr.rel (0) target = $region53
  $region52: #{bigru_crf_forward.1} parent=0 // pred_region
    _
  $region53: #{bigru_crf_forward.1} parent=0 // pred_fallthru
    _

</llo_original>
